<compile_context>
chip_gen: v6e
topology: v6e:2x2x1
jax: 0.10.0
libtpu: 0.0.40
codegen_flags: <defaults>
</compile_context>

<pallas_src>
import jax
import jax.numpy as jnp
from jax.experimental import pallas as pl
from jax.experimental.pallas import tpu as pltpu

HIDDEN = 768      # BERT-base hidden size
MID = 256         # nn.Linear(768, 256)
NCLS = 3          # nn.Linear(256, 3)
NCLS_PAD = 128    # minimum unmasked-store lane width; sliced back to NCLS outside
TB_MAX = 1024     # keeps double-buffered bf16 cls + f32 out well under v5e's 16 MiB scoped VMEM


def _round_up(x, m):
    return ((x + m - 1) // m) * m


def _pick_tb(batch):
    """Batch tile: large enough to amortize ~0.35us/step pipeline overhead and
    fill the MXU M dimension, 256-aligned for v6e/v7x's 2x256^2 MXU, >=2 grid
    steps once the batch allows (so dimension_semantics=("parallel",) shards
    across both v7x TensorCores), capped at TB_MAX for v5e."""
    if batch <= 32:
        return _round_up(max(batch, 16), 16)   # tiny batches: one small bf16-packed tile
    tb = _round_up((batch + 1) // 2, 256)      # aim for 2 grid steps (v7x: 2 TCs)
    return min(tb, TB_MAX)


def _head_kernel(cls_ref, w1_ref, b1_ref, w2_ref, b2_ref, o_ref):
    # cls_ref : (TB, HIDDEN)      bf16  — CLS hidden states, already bf16 (no in-kernel cast)
    # w1_ref  : (HIDDEN, MID)     bf16  — VMEM-resident (constant index map)
    # b1_ref  : (1, MID)          f32
    # w2_ref  : (MID, NCLS_PAD)   bf16  — zero-padded to lane-dense 128 columns
    # b2_ref  : (1, NCLS_PAD)     f32
    # o_ref   : (TB, NCLS_PAD)    f32   — lane-dense, unmasked stores
    h = jnp.dot(cls_ref[...], w1_ref[...], preferred_element_type=jnp.float32)
    h = jnp.maximum(h + b1_ref[...], 0.0)                    # f32 bias + ReLU (VPU)
    out = jnp.dot(h.astype(jnp.bfloat16), w2_ref[...],
                  preferred_element_type=jnp.float32)
    o_ref[...] = (out + b2_ref[...]).astype(o_ref.dtype)


def txtonly_head(cls_bf16, w1_bf16, b1, w2_pad, b2_pad, tb):
    """cls_bf16: (Bp, 768) bf16 with Bp % tb == 0. Returns (Bp, NCLS_PAD) f32."""
    bp, h = cls_bf16.shape
    assert h == HIDDEN and bp % tb == 0

    def build(weight_buffers):
        resident = lambda i: (0, 0)
        wkw = {} if weight_buffers is None else dict(
            pipeline_mode=pl.Buffered(weight_buffers))
        return pl.pallas_call(
            _head_kernel,
            out_shape=jax.ShapeDtypeStruct((bp, NCLS_PAD), jnp.float32),
            grid_spec=pltpu.PrefetchScalarGridSpec(
                num_scalar_prefetch=0,
                grid=(bp // tb,),
                in_specs=[
                    # only the (tb, 768) bf16 CLS slab moves per grid step
                    pl.BlockSpec((tb, HIDDEN), lambda i: (i, 0)),
                    # weights/biases: constant block index -> fetched once, VMEM-resident
                    pl.BlockSpec((HIDDEN, MID), resident, **wkw),
                    pl.BlockSpec((1, MID), resident, **wkw),
                    pl.BlockSpec((MID, NCLS_PAD), resident, **wkw),
                    pl.BlockSpec((1, NCLS_PAD), resident, **wkw),
                ],
                out_specs=pl.BlockSpec((tb, NCLS_PAD), lambda i: (i, 0)),
            ),
            compiler_params=pltpu.CompilerParams(
                dimension_semantics=("parallel",)),   # shards batch tiles across TCs (v7x)
        )

    try:
        # Weights are fetched once and never revisited: single-buffer them to
        # free ~450 KiB of VMEM headroom for the batch tile.
        return build(1)(cls_bf16, w1_bf16, b1, w2_pad, b2_pad)
    except Exception:
        # Fallback if this Pallas build rejects pipeline_mode=Buffered(1):
        # default double buffering still fits VMEM comfortably at TB_MAX.
        return build(None)(cls_bf16, w1_bf16, b1, w2_pad, b2_pad)


def txtonly_model_forward(input_ids, attention_mask, image, params):
    del image  # ignored by the reference forward pass as well
    B = input_ids.shape[0]
    tb = _pick_tb(B)
    bp = _round_up(B, tb)
    # TODO(synk): stands in for the pretrained BertModel encoder (no checkpoint
    # weights available in-script); only the CLS (position-0) hidden state feeds
    # the head, so just that (B, 768) slice is produced — no (B, S, 768)
    # intermediate is ever materialized in HBM or DMA'd into VMEM.
    ids0 = input_ids[:, 0]
    mask0 = attention_mask[:, 0]
    if bp != B:
        # Pad only the cheap (B,) id/mask vectors; the gather below then emits
        # the padded (bp, 768) bf16 slab directly — no extra pad copy of the
        # large activation stream.
        ids0 = jnp.pad(ids0, (0, bp - B))
        mask0 = jnp.pad(mask0, (0, bp - B))
    # Embedding gather from a pre-cast bf16 table fuses the bf16 cast into the
    # gather (halves gather + kernel-input HBM traffic); mask is exact in bf16.
    cls = params["emb_bf16"][ids0] * mask0[:, None].astype(jnp.bfloat16)
    out = txtonly_head(cls,
                       params["w1_bf16"], params["b1"],
                       params["w2_pad"], params["b2_pad"], tb)
    return out[:B, :NCLS]


def _reference(input_ids, attention_mask, params):
    # Full-precision reference of the module semantics (CLS -> 768->256 -> ReLU -> 256->3)
    cls = params["emb"][input_ids[:, 0]]
    cls = cls * attention_mask[:, 0, None].astype(cls.dtype)
    h = jnp.maximum(cls @ params["w1"] + params["b1"][0], 0.0)
    return h @ params["w2"] + params["b2"][0]


def make_params(key, vocab):
    k_emb, k_w1, k_b1, k_w2, k_b2 = jax.random.split(key, 5)
    emb = jax.random.normal(k_emb, (vocab, HIDDEN), jnp.float32) * 0.02
    w1 = jax.random.normal(k_w1, (HIDDEN, MID), jnp.float32) * 0.02
    b1 = jax.random.normal(k_b1, (1, MID), jnp.float32) * 0.02
    w2 = jax.random.normal(k_w2, (MID, NCLS), jnp.float32) * 0.02
    b2 = jax.random.normal(k_b2, (1, NCLS), jnp.float32) * 0.02
    params = {
        "emb": emb, "w1": w1, "b1": b1, "w2": w2, "b2": b2,
        # kernel-side weights: bf16 MXU inputs, lane-dense padded output head
        "emb_bf16": emb.astype(jnp.bfloat16),
        "w1_bf16": w1.astype(jnp.bfloat16),
        "w2_pad": jnp.pad(w2, ((0, 0), (0, NCLS_PAD - NCLS))).astype(jnp.bfloat16),
        "b2_pad": jnp.pad(b2, ((0, 0), (0, NCLS_PAD - NCLS))),
    }
    return params


if __name__ == "__main__":
    key = jax.random.PRNGKey(0)
    k_params, k_ids, k_img = jax.random.split(key, 3)

    B, S = 2, 8
    VOCAB = 100

    params = make_params(k_params, VOCAB)

    input_ids = jax.random.randint(k_ids, (B, S), 0, VOCAB, jnp.int32)
    attention_mask = jnp.ones((B, S), jnp.int32)
    image = jax.random.normal(k_img, (B, 3, 16, 16), jnp.float32)  # unused

    out = txtonly_model_forward(input_ids, attention_mask, image, params)
    out = jax.block_until_ready(out)

    ref = _reference(input_ids, attention_mask, params)
    assert out.shape == (B, NCLS)
    # bf16 activations/weights with f32 accumulation -> loosened tolerance vs f32 reference
    assert jnp.allclose(out, ref, atol=5e-3, rtol=5e-2)

    print("KERNEL_OK")
</pallas_src>

<mosaic_0001>
module attributes {stable_mosaic.version = 11 : i64} {
  func.func @_head_kernel(%arg0: i32, %arg1: memref<16x768xbf16, #tpu.memory_space<vmem>>, %arg2: memref<768x256xbf16, #tpu.memory_space<vmem>>, %arg3: memref<1x256xf32, #tpu.memory_space<vmem>>, %arg4: memref<256x128xbf16, #tpu.memory_space<vmem>>, %arg5: memref<1x128xf32, #tpu.memory_space<vmem>>, %arg6: memref<16x128xf32, #tpu.memory_space<vmem>>) attributes {dimension_semantics = [#tpu.dimension_semantics<parallel>], iteration_bounds = array<i64: 1>, scalar_prefetch = 0 : i64, scratch_operands = 0 : i64, tpu.core_type = #tpu.core_type<tc>, window_params = [{transform_indices = @transform_0, window_bounds = array<i64: 16, 768>}, {pipeline_mode = #tpu.pipeline_mode<synchronous>, transform_indices = @transform_1, window_bounds = array<i64: 768, 256>}, {pipeline_mode = #tpu.pipeline_mode<synchronous>, transform_indices = @transform_2, window_bounds = array<i64: 1, 256>}, {pipeline_mode = #tpu.pipeline_mode<synchronous>, transform_indices = @transform_3, window_bounds = array<i64: 256, 128>}, {pipeline_mode = #tpu.pipeline_mode<synchronous>, transform_indices = @transform_4, window_bounds = array<i64: 1, 128>}, {transform_indices = @transform_5, window_bounds = array<i64: 16, 128>}]} {
    %c0 = arith.constant 0 : index
    %c0_0 = arith.constant 0 : index
    %0 = vector.load %arg1[%c0, %c0_0] : memref<16x768xbf16, #tpu.memory_space<vmem>>, vector<16x768xbf16>
    %c0_1 = arith.constant 0 : index
    %c0_2 = arith.constant 0 : index
    %1 = vector.load %arg2[%c0_1, %c0_2] : memref<768x256xbf16, #tpu.memory_space<vmem>>, vector<768x256xbf16>
    %cst = arith.constant dense<0.000000e+00> : vector<16x256xf32>
    %2 = tpu.matmul %0, %1, %cst {dimension_numbers = #tpu.dot_dimension_numbers<[1], [0], [0], [1], [0, 0, 1, 1], [], []>} : vector<16x768xbf16>, vector<768x256xbf16>, vector<16x256xf32> -> vector<16x256xf32>
    %c0_3 = arith.constant 0 : index
    %c0_4 = arith.constant 0 : index
    %3 = vector.load %arg3[%c0_3, %c0_4] : memref<1x256xf32, #tpu.memory_space<vmem>>, vector<1x256xf32>
    %4 = vector.broadcast %3 : vector<1x256xf32> to vector<16x256xf32>
    %5 = arith.addf %2, %4 : vector<16x256xf32>
    %cst_5 = arith.constant 0.000000e+00 : f32
    %6 = vector.broadcast %cst_5 : f32 to vector<16x256xf32>
    %7 = arith.maximumf %5, %6 : vector<16x256xf32>
    %8 = arith.truncf %7 : vector<16x256xf32> to vector<16x256xbf16>
    %c0_6 = arith.constant 0 : index
    %c0_7 = arith.constant 0 : index
    %9 = vector.load %arg4[%c0_6, %c0_7] : memref<256x128xbf16, #tpu.memory_space<vmem>>, vector<256x128xbf16>
    %cst_8 = arith.constant dense<0.000000e+00> : vector<16x128xf32>
    %10 = tpu.matmul %8, %9, %cst_8 {dimension_numbers = #tpu.dot_dimension_numbers<[1], [0], [0], [1], [0, 0, 1, 1], [], []>} : vector<16x256xbf16>, vector<256x128xbf16>, vector<16x128xf32> -> vector<16x128xf32>
    %c0_9 = arith.constant 0 : index
    %c0_10 = arith.constant 0 : index
    %11 = vector.load %arg5[%c0_9, %c0_10] : memref<1x128xf32, #tpu.memory_space<vmem>>, vector<1x128xf32>
    %12 = vector.broadcast %11 : vector<1x128xf32> to vector<16x128xf32>
    %13 = arith.addf %10, %12 : vector<16x128xf32>
    %c0_11 = arith.constant 0 : index
    %c0_12 = arith.constant 0 : index
    %14 = vector.load %arg6[%c0_11, %c0_12] : memref<16x128xf32, #tpu.memory_space<vmem>>, vector<16x128xf32>
    tpu.vector_store %arg6[%c0_11, %c0_12], %13 {strides = array<i32>} : memref<16x128xf32, #tpu.memory_space<vmem>>, vector<16x128xf32>,
    return
  }
  func.func @transform_0(%arg0: i32) -> (i32, i32) {
    %c0_i32 = arith.constant 0 : i32
    %c0_i32_0 = arith.constant 0 : i32
    return %arg0, %c0_i32 : i32, i32
  }
  func.func @transform_1(%arg0: i32) -> (i32, i32) {
    %c0_i32 = arith.constant 0 : i32
    %c0_i32_0 = arith.constant 0 : i32
    %c0_i32_1 = arith.constant 0 : i32
    return %c0_i32, %c0_i32_0 : i32, i32
  }
  func.func @transform_2(%arg0: i32) -> (i32, i32) {
    %c0_i32 = arith.constant 0 : i32
    %c0_i32_0 = arith.constant 0 : i32
    %c0_i32_1 = arith.constant 0 : i32
    return %c0_i32, %c0_i32_0 : i32, i32
  }
  func.func @transform_3(%arg0: i32) -> (i32, i32) {
    %c0_i32 = arith.constant 0 : i32
    %c0_i32_0 = arith.constant 0 : i32
    %c0_i32_1 = arith.constant 0 : i32
    return %c0_i32, %c0_i32_0 : i32, i32
  }
  func.func @transform_4(%arg0: i32) -> (i32, i32) {
    %c0_i32 = arith.constant 0 : i32
    %c0_i32_0 = arith.constant 0 : i32
    %c0_i32_1 = arith.constant 0 : i32
    return %c0_i32, %c0_i32_0 : i32, i32
  }
  func.func @transform_5(%arg0: i32) -> (i32, i32) {
    %c0_i32 = arith.constant 0 : i32
    %c0_i32_0 = arith.constant 0 : i32
    return %arg0, %c0_i32 : i32, i32
  }
}

module attributes {stable_mosaic.version = 11 : i64} {
  func.func @_head_kernel(%arg0: i32, %arg1: memref<16x768xbf16, #tpu.memory_space<vmem>>, %arg2: memref<768x256xbf16, #tpu.memory_space<vmem>>, %arg3: memref<1x256xf32, #tpu.memory_space<vmem>>, %arg4: memref<256x128xbf16, #tpu.memory_space<vmem>>, %arg5: memref<1x128xf32, #tpu.memory_space<vmem>>, %arg6: memref<16x128xf32, #tpu.memory_space<vmem>>) attributes {dimension_semantics = [#tpu.dimension_semantics<parallel>], iteration_bounds = array<i64: 1>, scalar_prefetch = 0 : i64, scratch_operands = 0 : i64, tpu.core_type = #tpu.core_type<tc>, window_params = [{transform_indices = @transform_0, window_bounds = array<i64: 16, 768>}, {pipeline_mode = #tpu.pipeline_mode<synchronous>, transform_indices = @transform_1, window_bounds = array<i64: 768, 256>}, {pipeline_mode = #tpu.pipeline_mode<synchronous>, transform_indices = @transform_2, window_bounds = array<i64: 1, 256>}, {pipeline_mode = #tpu.pipeline_mode<synchronous>, transform_indices = @transform_3, window_bounds = array<i64: 256, 128>}, {pipeline_mode = #tpu.pipeline_mode<synchronous>, transform_indices = @transform_4, window_bounds = array<i64: 1, 128>}, {transform_indices = @transform_5, window_bounds = array<i64: 16, 128>}]} {
    %c0 = arith.constant 0 : index
    %c0_0 = arith.constant 0 : index
    %0 = vector.load %arg1[%c0, %c0_0] : memref<16x768xbf16, #tpu.memory_space<vmem>>, vector<16x768xbf16>
    %c0_1 = arith.constant 0 : index
    %c0_2 = arith.constant 0 : index
    %1 = vector.load %arg2[%c0_1, %c0_2] : memref<768x256xbf16, #tpu.memory_space<vmem>>, vector<768x256xbf16>
    %cst = arith.constant dense<0.000000e+00> : vector<16x256xf32>
    %2 = tpu.matmul %0, %1, %cst {dimension_numbers = #tpu.dot_dimension_numbers<[1], [0], [0], [1], [0, 0, 1, 1], [], []>} : vector<16x768xbf16>, vector<768x256xbf16>, vector<16x256xf32> -> vector<16x256xf32>
    %c0_3 = arith.constant 0 : index
    %c0_4 = arith.constant 0 : index
    %3 = vector.load %arg3[%c0_3, %c0_4] : memref<1x256xf32, #tpu.memory_space<vmem>>, vector<1x256xf32>
    %4 = vector.broadcast %3 : vector<1x256xf32> to vector<16x256xf32>
    %5 = arith.addf %2, %4 : vector<16x256xf32>
    %cst_5 = arith.constant 0.000000e+00 : f32
    %6 = vector.broadcast %cst_5 : f32 to vector<16x256xf32>
    %7 = arith.maximumf %5, %6 : vector<16x256xf32>
    %8 = arith.truncf %7 : vector<16x256xf32> to vector<16x256xbf16>
    %c0_6 = arith.constant 0 : index
    %c0_7 = arith.constant 0 : index
    %9 = vector.load %arg4[%c0_6, %c0_7] : memref<256x128xbf16, #tpu.memory_space<vmem>>, vector<256x128xbf16>
    %cst_8 = arith.constant dense<0.000000e+00> : vector<16x128xf32>
    %10 = tpu.matmul %8, %9, %cst_8 {dimension_numbers = #tpu.dot_dimension_numbers<[1], [0], [0], [1], [0, 0, 1, 1], [], []>} : vector<16x256xbf16>, vector<256x128xbf16>, vector<16x128xf32> -> vector<16x128xf32>
    %c0_9 = arith.constant 0 : index
    %c0_10 = arith.constant 0 : index
    %11 = vector.load %arg5[%c0_9, %c0_10] : memref<1x128xf32, #tpu.memory_space<vmem>>, vector<1x128xf32>
    %12 = vector.broadcast %11 : vector<1x128xf32> to vector<16x128xf32>
    %13 = arith.addf %10, %12 : vector<16x128xf32>
    %c0_11 = arith.constant 0 : index
    %c0_12 = arith.constant 0 : index
    %14 = vector.load %arg6[%c0_11, %c0_12] : memref<16x128xf32, #tpu.memory_space<vmem>>, vector<16x128xf32>
    tpu.vector_store %arg6[%c0_11, %c0_12], %13 {strides = array<i32>} : memref<16x128xf32, #tpu.memory_space<vmem>>, vector<16x128xf32>,
    return
  }
  func.func @transform_0(%arg0: i32) -> (i32, i32) {
    %c0_i32 = arith.constant 0 : i32
    %c0_i32_0 = arith.constant 0 : i32
    return %arg0, %c0_i32 : i32, i32
  }
  func.func @transform_1(%arg0: i32) -> (i32, i32) {
    %c0_i32 = arith.constant 0 : i32
    %c0_i32_0 = arith.constant 0 : i32
    %c0_i32_1 = arith.constant 0 : i32
    return %c0_i32, %c0_i32_0 : i32, i32
  }
  func.func @transform_2(%arg0: i32) -> (i32, i32) {
    %c0_i32 = arith.constant 0 : i32
    %c0_i32_0 = arith.constant 0 : i32
    %c0_i32_1 = arith.constant 0 : i32
    return %c0_i32, %c0_i32_0 : i32, i32
  }
  func.func @transform_3(%arg0: i32) -> (i32, i32) {
    %c0_i32 = arith.constant 0 : i32
    %c0_i32_0 = arith.constant 0 : i32
    %c0_i32_1 = arith.constant 0 : i32
    return %c0_i32, %c0_i32_0 : i32, i32
  }
  func.func @transform_4(%arg0: i32) -> (i32, i32) {
    %c0_i32 = arith.constant 0 : i32
    %c0_i32_0 = arith.constant 0 : i32
    %c0_i32_1 = arith.constant 0 : i32
    return %c0_i32, %c0_i32_0 : i32, i32
  }
  func.func @transform_5(%arg0: i32) -> (i32, i32) {
    %c0_i32 = arith.constant 0 : i32
    %c0_i32_0 = arith.constant 0 : i32
    return %arg0, %c0_i32 : i32, i32
  }
}

</mosaic_0001>

<llo_original>
// kernel: tpu_custom_call.1
$region0: #{tpu_custom_call.1}
  #allocation0 [shape = 'u32[]', space=smem, size = 0x4, offset = 0x4, fixed_abs, tag = 'smem constant byte address 0x4 - core index']
  #allocation1 [shape = 'u32[144,128]{1,0:T(1,128)}', space=vmem, size = 0x12000, scoped, tag = 'internal scratch']
  %s0 = inlined_call_operand.hbm [shape: bf16[16,768], index: 0, kind: input, shape index: {}]
  %s1 = inlined_call_operand.hbm [shape: bf16[768,256], index: 1, kind: input, shape index: {}]
  %s2 = inlined_call_operand.vmem [shape: f32[1,256], index: 2, kind: input, shape index: {}]
  %s3 = inlined_call_operand.hbm [shape: bf16[256,128], index: 3, kind: input, shape index: {}]
  %s4 = inlined_call_operand.vmem [shape: f32[1,128], index: 4, kind: input, shape index: {}]
  %s5 = inlined_call_operand.hbm [shape: f32[16,128], index: 5, kind: output, shape index: {}]
  %s6 = sld [smem:[#allocation0]]
  $region42: #{tpu_custom_call.1} parent=0
    _
  %s8 = ssub.s32 1, %s6
  %s9 = scalar_select 0, %s8, %s6
  $region1: #{tpu_custom_call.1} parent=0
    #allocation2 [shape = 'u8[24576]{0}', space=vmem, size = 0x6000, scoped, tag = 'input window, operand 0, single buffered']
    #allocation3 [shape = 's32[1]{0}', space=sflag, size = 0x4, scoped, tag = 'scoped memory for tpu_custom_call.1']
    #allocation4 [shape = 's32[1]{0}', space=sflag, size = 0x4, scoped, tag = 'scoped memory for tpu_custom_call.1']
    #allocation5 [shape = 'u8[393216]{0}', space=vmem, size = 0x60000, scoped, tag = 'input window, operand 1, single buffered']
    #allocation6 [shape = 's32[1]{0}', space=sflag, size = 0x4, scoped, tag = 'scoped memory for tpu_custom_call.1']
    #allocation7 [shape = 'u8[65536]{0}', space=vmem, size = 0x10000, scoped, tag = 'input window, operand 3, single buffered']
    #allocation8 [shape = 'u8[8192]{0}', space=vmem, size = 0x2000, scoped, tag = 'output window, operand 0, single buffered']
    %10 = vsyncpa [#allocation3], 0
    %11 = vsyncpa [#allocation6], 0
    %12 = vsyncpa [#allocation4], 0
    // Predicated region
    $region2: #{tpu_custom_call.1} parent=1 // pred_check
      _
    $region3: #{tpu_custom_call.1} parent=1 // pred_check_branch
      %14 = sbr.rel (0) target = $region5
    $region4: #{tpu_custom_call.1} parent=1 // pred_region
      %s16 = ssub.s32 768, 768
      %17 = vsyncadd [#allocation3], %s16
      %s18 = sshll.u32 [#allocation2], 4
      %s19 = int_to_ptr.vmem [resolvable:$true] %s18
      %24 = dma.hbm_to_vmem [thread:$0]  %s0, 768, %s19, [#allocation3], 384, 384, 24
    $region5: #{tpu_custom_call.1} parent=1 // pred_fallthru
      _
    // Predicated region
    $region6: #{tpu_custom_call.1} parent=1 // pred_check
      _
    $region7: #{tpu_custom_call.1} parent=1 // pred_check_branch
      %26 = sbr.rel (0) target = $region9
    $region8: #{tpu_custom_call.1} parent=1 // pred_region
      %s28 = ssub.s32 12288, 12288
      %29 = vsyncadd [#allocation6], %s28
      %s30 = sshll.u32 [#allocation5], 4
      %s31 = int_to_ptr.vmem [resolvable:$true] %s30
      %36 = dma.hbm_to_vmem [thread:$0]  %s1, 12288, %s31, [#allocation6], 128, 128, 8
    $region9: #{tpu_custom_call.1} parent=1 // pred_fallthru
      _
    // Predicated region
    $region10: #{tpu_custom_call.1} parent=1 // pred_check
      _
    $region11: #{tpu_custom_call.1} parent=1 // pred_check_branch
      %38 = sbr.rel (0) target = $region13
    $region12: #{tpu_custom_call.1} parent=1 // pred_region
      _
    $region13: #{tpu_custom_call.1} parent=1 // pred_fallthru
      _
    // Predicated region
    $region14: #{tpu_custom_call.1} parent=1 // pred_check
      _
    $region15: #{tpu_custom_call.1} parent=1 // pred_check_branch
      %40 = sbr.rel (0) target = $region17
    $region16: #{tpu_custom_call.1} parent=1 // pred_region
      %s42 = ssub.s32 2048, 2048
      %43 = vsyncadd [#allocation6], %s42
      %s44 = sshll.u32 [#allocation7], 4
      %s45 = int_to_ptr.vmem [resolvable:$true] %s44
      %50 = dma.hbm_to_vmem [thread:$0]  %s3, 2048, %s45, [#allocation6], 64, 64, 4
    $region17: #{tpu_custom_call.1} parent=1 // pred_fallthru
      _
    // Predicated region
    $region18: #{tpu_custom_call.1} parent=1 // pred_check
      _
    $region19: #{tpu_custom_call.1} parent=1 // pred_check_branch
      %52 = sbr.rel (0) target = $region21
    $region20: #{tpu_custom_call.1} parent=1 // pred_region
      _
    $region21: #{tpu_custom_call.1} parent=1 // pred_fallthru
      _
    // Predicated region
    $region22: #{tpu_custom_call.1} parent=1 // pred_check
      _
    $region23: #{tpu_custom_call.1} parent=1 // pred_check_branch
      %54 = sbr.rel (0) target = $region25
    $region24: #{tpu_custom_call.1} parent=1 // pred_region
      %55 = dma.done [#allocation3], 768
    $region25: #{tpu_custom_call.1} parent=1 // pred_fallthru
      _
    // Predicated region
    $region26: #{tpu_custom_call.1} parent=1 // pred_check
      _
    $region27: #{tpu_custom_call.1} parent=1 // pred_check_branch
      %57 = sbr.rel (0) target = $region29
    $region28: #{tpu_custom_call.1} parent=1 // pred_region
      %58 = dma.done [#allocation6], 12288
    $region29: #{tpu_custom_call.1} parent=1 // pred_fallthru
      _
    // Predicated region
    $region30: #{tpu_custom_call.1} parent=1 // pred_check
      _
    $region31: #{tpu_custom_call.1} parent=1 // pred_check_branch
      %60 = sbr.rel (0) target = $region33
    $region32: #{tpu_custom_call.1} parent=1 // pred_region
      %61 = dma.done [#allocation6], 2048
    $region33: #{tpu_custom_call.1} parent=1 // pred_fallthru
      _
    %v63 = vld [vmem:[#allocation2] sm:$0xff]
    %v64 = vld [vmem:[#allocation2 + $0x8] sm:$0xff]
    %v65 = vld [vmem:[#allocation2 + $0x10] sm:$0xff]
    %v66 = vld [vmem:[#allocation2 + $0x18] sm:$0xff]
    %v67 = vld [vmem:[#allocation2 + $0x20] sm:$0xff]
    %v68 = vld [vmem:[#allocation2 + $0x28] sm:$0xff]
    %v69 = vld [vmem:[#allocation5] sm:$0xff]
    %v70 = vld [vmem:[#allocation5 + $0x8] sm:$0xff]
    %v71 = vld [vmem:[#allocation5 + $0x10] sm:$0xff]
    %v72 = vld [vmem:[#allocation5 + $0x18] sm:$0xff]
    %v73 = vld [vmem:[#allocation5 + $0x20] sm:$0xff]
    %v74 = vld [vmem:[#allocation5 + $0x28] sm:$0xff]
    %v75 = vld [vmem:[#allocation5 + $0x30] sm:$0xff]
    %v76 = vld [vmem:[#allocation5 + $0x38] sm:$0xff]
    %v77 = vld [vmem:[#allocation5 + $0x40] sm:$0xff]
    %v78 = vld [vmem:[#allocation5 + $0x48] sm:$0xff]
    %v79 = vld [vmem:[#allocation5 + $0x50] sm:$0xff]
    %v80 = vld [vmem:[#allocation5 + $0x58] sm:$0xff]
    %v81 = vld [vmem:[#allocation5 + $0x60] sm:$0xff]
    %v82 = vld [vmem:[#allocation5 + $0x68] sm:$0xff]
    %v83 = vld [vmem:[#allocation5 + $0x70] sm:$0xff]
    %v84 = vld [vmem:[#allocation5 + $0x78] sm:$0xff]
    %v85 = vld [vmem:[#allocation5 + $0x80] sm:$0xff]
    %v86 = vld [vmem:[#allocation5 + $0x88] sm:$0xff]
    %v87 = vld [vmem:[#allocation5 + $0x90] sm:$0xff]
    %v88 = vld [vmem:[#allocation5 + $0x98] sm:$0xff]
    %v89 = vld [vmem:[#allocation5 + $0xa0] sm:$0xff]
    %v90 = vld [vmem:[#allocation5 + $0xa8] sm:$0xff]
    %v91 = vld [vmem:[#allocation5 + $0xb0] sm:$0xff]
    %v92 = vld [vmem:[#allocation5 + $0xb8] sm:$0xff]
    %v93 = vld [vmem:[#allocation5 + $0xc0] sm:$0xff]
    %v94 = vld [vmem:[#allocation5 + $0xc8] sm:$0xff]
    %v95 = vld [vmem:[#allocation5 + $0xd0] sm:$0xff]
    %v96 = vld [vmem:[#allocation5 + $0xd8] sm:$0xff]
    %v97 = vld [vmem:[#allocation5 + $0xe0] sm:$0xff]
    %v98 = vld [vmem:[#allocation5 + $0xe8] sm:$0xff]
    %v99 = vld [vmem:[#allocation5 + $0xf0] sm:$0xff]
    %v100 = vld [vmem:[#allocation5 + $0xf8] sm:$0xff]
    %v101 = vld [vmem:[#allocation5 + $0x100] sm:$0xff]
    %v102 = vld [vmem:[#allocation5 + $0x108] sm:$0xff]
    %v103 = vld [vmem:[#allocation5 + $0x110] sm:$0xff]
    %v104 = vld [vmem:[#allocation5 + $0x118] sm:$0xff]
    %v105 = vld [vmem:[#allocation5 + $0x120] sm:$0xff]
    %v106 = vld [vmem:[#allocation5 + $0x128] sm:$0xff]
    %v107 = vld [vmem:[#allocation5 + $0x130] sm:$0xff]
    %v108 = vld [vmem:[#allocation5 + $0x138] sm:$0xff]
    %v109 = vld [vmem:[#allocation5 + $0x140] sm:$0xff]
    %v110 = vld [vmem:[#allocation5 + $0x148] sm:$0xff]
    %v111 = vld [vmem:[#allocation5 + $0x150] sm:$0xff]
    %v112 = vld [vmem:[#allocation5 + $0x158] sm:$0xff]
    %v113 = vld [vmem:[#allocation5 + $0x160] sm:$0xff]
    %v114 = vld [vmem:[#allocation5 + $0x168] sm:$0xff]
    %v115 = vld [vmem:[#allocation5 + $0x170] sm:$0xff]
    %v116 = vld [vmem:[#allocation5 + $0x178] sm:$0xff]
    %v117 = vld [vmem:[#allocation5 + $0x180] sm:$0xff]
    %v118 = vld [vmem:[#allocation5 + $0x188] sm:$0xff]
    %v119 = vld [vmem:[#allocation5 + $0x190] sm:$0xff]
    %v120 = vld [vmem:[#allocation5 + $0x198] sm:$0xff]
    %v121 = vld [vmem:[#allocation5 + $0x1a0] sm:$0xff]
    %v122 = vld [vmem:[#allocation5 + $0x1a8] sm:$0xff]
    %v123 = vld [vmem:[#allocation5 + $0x1b0] sm:$0xff]
    %v124 = vld [vmem:[#allocation5 + $0x1b8] sm:$0xff]
    %v125 = vld [vmem:[#allocation5 + $0x1c0] sm:$0xff]
    %v126 = vld [vmem:[#allocation5 + $0x1c8] sm:$0xff]
    %v127 = vld [vmem:[#allocation5 + $0x1d0] sm:$0xff]
    %v128 = vld [vmem:[#allocation5 + $0x1d8] sm:$0xff]
    %v129 = vld [vmem:[#allocation5 + $0x1e0] sm:$0xff]
    %v130 = vld [vmem:[#allocation5 + $0x1e8] sm:$0xff]
    %v131 = vld [vmem:[#allocation5 + $0x1f0] sm:$0xff]
    %v132 = vld [vmem:[#allocation5 + $0x1f8] sm:$0xff]
    %v133 = vld [vmem:[#allocation5 + $0x200] sm:$0xff]
    %v134 = vld [vmem:[#allocation5 + $0x208] sm:$0xff]
    %v135 = vld [vmem:[#allocation5 + $0x210] sm:$0xff]
    %v136 = vld [vmem:[#allocation5 + $0x218] sm:$0xff]
    %v137 = vld [vmem:[#allocation5 + $0x220] sm:$0xff]
    %v138 = vld [vmem:[#allocation5 + $0x228] sm:$0xff]
    %v139 = vld [vmem:[#allocation5 + $0x230] sm:$0xff]
    %v140 = vld [vmem:[#allocation5 + $0x238] sm:$0xff]
    %v141 = vld [vmem:[#allocation5 + $0x240] sm:$0xff]
    %v142 = vld [vmem:[#allocation5 + $0x248] sm:$0xff]
    %v143 = vld [vmem:[#allocation5 + $0x250] sm:$0xff]
    %v144 = vld [vmem:[#allocation5 + $0x258] sm:$0xff]
    %v145 = vld [vmem:[#allocation5 + $0x260] sm:$0xff]
    %v146 = vld [vmem:[#allocation5 + $0x268] sm:$0xff]
    %v147 = vld [vmem:[#allocation5 + $0x270] sm:$0xff]
    %v148 = vld [vmem:[#allocation5 + $0x278] sm:$0xff]
    %v149 = vld [vmem:[#allocation5 + $0x280] sm:$0xff]
    %v150 = vld [vmem:[#allocation5 + $0x288] sm:$0xff]
    %v151 = vld [vmem:[#allocation5 + $0x290] sm:$0xff]
    %v152 = vld [vmem:[#allocation5 + $0x298] sm:$0xff]
    %v153 = vld [vmem:[#allocation5 + $0x2a0] sm:$0xff]
    %v154 = vld [vmem:[#allocation5 + $0x2a8] sm:$0xff]
    %v155 = vld [vmem:[#allocation5 + $0x2b0] sm:$0xff]
    %v156 = vld [vmem:[#allocation5 + $0x2b8] sm:$0xff]
    %v157 = vld [vmem:[#allocation5 + $0x2c0] sm:$0xff]
    %v158 = vld [vmem:[#allocation5 + $0x2c8] sm:$0xff]
    %v159 = vld [vmem:[#allocation5 + $0x2d0] sm:$0xff]
    %v160 = vld [vmem:[#allocation5 + $0x2d8] sm:$0xff]
    %v161 = vld [vmem:[#allocation5 + $0x2e0] sm:$0xff]
    %v162 = vld [vmem:[#allocation5 + $0x2e8] sm:$0xff]
    %v163 = vld [vmem:[#allocation5 + $0x2f0] sm:$0xff]
    %v164 = vld [vmem:[#allocation5 + $0x2f8] sm:$0xff]
    %v165 = vld [vmem:[%s2] sm:$0x3]
    %v167 = vlaneseq
    %v168 = vshrl.u32 %v167, 7
    %v169 = vsub.s32 0, %v168
    %v170 = vrot.slane %v165, %v169
    %v171 = vlaneseq
    %v172 = vshrl.u32 %v171, 7
    %v173 = vsub.s32 1, %v172
    %v174 = vrot.slane %v165, %v173
    %v183 = vunpack.c.l.b16 %v63
    %v184 = vunpack.c.h.b16 %v63
    %v185 = vunpack.c.l.b16 %v64
    %v186 = vunpack.c.h.b16 %v64
    %v187 = vunpack.c.l.b16 %v65
    %v188 = vunpack.c.h.b16 %v65
    %v189 = vunpack.c.l.b16 %v66
    %v190 = vunpack.c.h.b16 %v66
    %v191 = vunpack.c.l.b16 %v67
    %v192 = vunpack.c.h.b16 %v67
    %v193 = vunpack.c.l.b16 %v68
    %v194 = vunpack.c.h.b16 %v68
    %v195 = vpack.c.b16 %v189, %v183
    %v196 = vpack.c.b16 %v190, %v184
    %v197 = vpack.c.b16 %v191, %v185
    %v198 = vpack.c.b16 %v192, %v186
    %v199 = vpack.c.b16 %v193, %v187
    %v200 = vpack.c.b16 %v194, %v188
    %v303 = vunpack.c.l.b16 %v69
    %v304 = vunpack.c.h.b16 %v69
    %v305 = vunpack.c.l.b16 %v70
    %v306 = vunpack.c.h.b16 %v70
    %v307 = vunpack.c.l.b16 %v71
    %v308 = vunpack.c.h.b16 %v71
    %v309 = vunpack.c.l.b16 %v72
    %v310 = vunpack.c.h.b16 %v72
    %v311 = vunpack.c.l.b16 %v73
    %v312 = vunpack.c.h.b16 %v73
    %v313 = vunpack.c.l.b16 %v74
    %v314 = vunpack.c.h.b16 %v74
    %v315 = vunpack.c.l.b16 %v75
    %v316 = vunpack.c.h.b16 %v75
    %v317 = vunpack.c.l.b16 %v76
    %v318 = vunpack.c.h.b16 %v76
    %v319 = vunpack.c.l.b16 %v77
    %v320 = vunpack.c.h.b16 %v77
    %v321 = vunpack.c.l.b16 %v78
    %v322 = vunpack.c.h.b16 %v78
    %v323 = vunpack.c.l.b16 %v79
    %v324 = vunpack.c.h.b16 %v79
    %v325 = vunpack.c.l.b16 %v80
    %v326 = vunpack.c.h.b16 %v80
    %v327 = vunpack.c.l.b16 %v81
    %v328 = vunpack.c.h.b16 %v81
    %v329 = vunpack.c.l.b16 %v82
    %v330 = vunpack.c.h.b16 %v82
    %v331 = vunpack.c.l.b16 %v83
    %v332 = vunpack.c.h.b16 %v83
    %v333 = vunpack.c.l.b16 %v84
    %v334 = vunpack.c.h.b16 %v84
    %v335 = vunpack.c.l.b16 %v85
    %v336 = vunpack.c.h.b16 %v85
    %v337 = vunpack.c.l.b16 %v86
    %v338 = vunpack.c.h.b16 %v86
    %v339 = vunpack.c.l.b16 %v87
    %v340 = vunpack.c.h.b16 %v87
    %v341 = vunpack.c.l.b16 %v88
    %v342 = vunpack.c.h.b16 %v88
    %v343 = vunpack.c.l.b16 %v89
    %v344 = vunpack.c.h.b16 %v89
    %v345 = vunpack.c.l.b16 %v90
    %v346 = vunpack.c.h.b16 %v90
    %v347 = vunpack.c.l.b16 %v91
    %v348 = vunpack.c.h.b16 %v91
    %v349 = vunpack.c.l.b16 %v92
    %v350 = vunpack.c.h.b16 %v92
    %v351 = vunpack.c.l.b16 %v93
    %v352 = vunpack.c.h.b16 %v93
    %v353 = vunpack.c.l.b16 %v94
    %v354 = vunpack.c.h.b16 %v94
    %v355 = vunpack.c.l.b16 %v95
    %v356 = vunpack.c.h.b16 %v95
    %v357 = vunpack.c.l.b16 %v96
    %v358 = vunpack.c.h.b16 %v96
    %v359 = vunpack.c.l.b16 %v97
    %v360 = vunpack.c.h.b16 %v97
    %v361 = vunpack.c.l.b16 %v98
    %v362 = vunpack.c.h.b16 %v98
    %v363 = vunpack.c.l.b16 %v99
    %v364 = vunpack.c.h.b16 %v99
    %v365 = vunpack.c.l.b16 %v100
    %v366 = vunpack.c.h.b16 %v100
    %v367 = vunpack.c.l.b16 %v101
    %v368 = vunpack.c.h.b16 %v101
    %v369 = vunpack.c.l.b16 %v102
    %v370 = vunpack.c.h.b16 %v102
    %v371 = vunpack.c.l.b16 %v103
    %v372 = vunpack.c.h.b16 %v103
    %v373 = vunpack.c.l.b16 %v104
    %v374 = vunpack.c.h.b16 %v104
    %v375 = vunpack.c.l.b16 %v105
    %v376 = vunpack.c.h.b16 %v105
    %v377 = vunpack.c.l.b16 %v106
    %v378 = vunpack.c.h.b16 %v106
    %v379 = vunpack.c.l.b16 %v107
    %v380 = vunpack.c.h.b16 %v107
    %v381 = vunpack.c.l.b16 %v108
    %v382 = vunpack.c.h.b16 %v108
    %v383 = vunpack.c.l.b16 %v109
    %v384 = vunpack.c.h.b16 %v109
    %v385 = vunpack.c.l.b16 %v110
    %v386 = vunpack.c.h.b16 %v110
    %v387 = vunpack.c.l.b16 %v111
    %v388 = vunpack.c.h.b16 %v111
    %v389 = vunpack.c.l.b16 %v112
    %v390 = vunpack.c.h.b16 %v112
    %v391 = vunpack.c.l.b16 %v113
    %v392 = vunpack.c.h.b16 %v113
    %v393 = vunpack.c.l.b16 %v114
    %v394 = vunpack.c.h.b16 %v114
    %v395 = vunpack.c.l.b16 %v115
    %v396 = vunpack.c.h.b16 %v115
    %v397 = vunpack.c.l.b16 %v116
    %v398 = vunpack.c.h.b16 %v116
    %v399 = vunpack.c.l.b16 %v117
    %v400 = vunpack.c.h.b16 %v117
    %v401 = vunpack.c.l.b16 %v118
    %v402 = vunpack.c.h.b16 %v118
    %v403 = vunpack.c.l.b16 %v119
    %v404 = vunpack.c.h.b16 %v119
    %v405 = vunpack.c.l.b16 %v120
    %v406 = vunpack.c.h.b16 %v120
    %v407 = vunpack.c.l.b16 %v121
    %v408 = vunpack.c.h.b16 %v121
    %v409 = vunpack.c.l.b16 %v122
    %v410 = vunpack.c.h.b16 %v122
    %v411 = vunpack.c.l.b16 %v123
    %v412 = vunpack.c.h.b16 %v123
    %v413 = vunpack.c.l.b16 %v124
    %v414 = vunpack.c.h.b16 %v124
    %v415 = vunpack.c.l.b16 %v125
    %v416 = vunpack.c.h.b16 %v125
    %v417 = vunpack.c.l.b16 %v126
    %v418 = vunpack.c.h.b16 %v126
    %v419 = vunpack.c.l.b16 %v127
    %v420 = vunpack.c.h.b16 %v127
    %v421 = vunpack.c.l.b16 %v128
    %v422 = vunpack.c.h.b16 %v128
    %v423 = vunpack.c.l.b16 %v129
    %v424 = vunpack.c.h.b16 %v129
    %v425 = vunpack.c.l.b16 %v130
    %v426 = vunpack.c.h.b16 %v130
    %v427 = vunpack.c.l.b16 %v131
    %v428 = vunpack.c.h.b16 %v131
    %v429 = vunpack.c.l.b16 %v132
    %v430 = vunpack.c.h.b16 %v132
    %v431 = vunpack.c.l.b16 %v133
    %v432 = vunpack.c.h.b16 %v133
    %v433 = vunpack.c.l.b16 %v134
    %v434 = vunpack.c.h.b16 %v134
    %v435 = vunpack.c.l.b16 %v135
    %v436 = vunpack.c.h.b16 %v135
    %v437 = vunpack.c.l.b16 %v136
    %v438 = vunpack.c.h.b16 %v136
    %v439 = vunpack.c.l.b16 %v137
    %v440 = vunpack.c.h.b16 %v137
    %v441 = vunpack.c.l.b16 %v138
    %v442 = vunpack.c.h.b16 %v138
    %v443 = vunpack.c.l.b16 %v139
    %v444 = vunpack.c.h.b16 %v139
    %v445 = vunpack.c.l.b16 %v140
    %v446 = vunpack.c.h.b16 %v140
    %v447 = vunpack.c.l.b16 %v141
    %v448 = vunpack.c.h.b16 %v141
    %v449 = vunpack.c.l.b16 %v142
    %v450 = vunpack.c.h.b16 %v142
    %v451 = vunpack.c.l.b16 %v143
    %v452 = vunpack.c.h.b16 %v143
    %v453 = vunpack.c.l.b16 %v144
    %v454 = vunpack.c.h.b16 %v144
    %v455 = vunpack.c.l.b16 %v145
    %v456 = vunpack.c.h.b16 %v145
    %v457 = vunpack.c.l.b16 %v146
    %v458 = vunpack.c.h.b16 %v146
    %v459 = vunpack.c.l.b16 %v147
    %v460 = vunpack.c.h.b16 %v147
    %v461 = vunpack.c.l.b16 %v148
    %v462 = vunpack.c.h.b16 %v148
    %v463 = vunpack.c.l.b16 %v149
    %v464 = vunpack.c.h.b16 %v149
    %v465 = vunpack.c.l.b16 %v150
    %v466 = vunpack.c.h.b16 %v150
    %v467 = vunpack.c.l.b16 %v151
    %v468 = vunpack.c.h.b16 %v151
    %v469 = vunpack.c.l.b16 %v152
    %v470 = vunpack.c.h.b16 %v152
    %v471 = vunpack.c.l.b16 %v153
    %v472 = vunpack.c.h.b16 %v153
    %v473 = vunpack.c.l.b16 %v154
    %v474 = vunpack.c.h.b16 %v154
    %v475 = vunpack.c.l.b16 %v155
    %v476 = vunpack.c.h.b16 %v155
    %v477 = vunpack.c.l.b16 %v156
    %v478 = vunpack.c.h.b16 %v156
    %v479 = vunpack.c.l.b16 %v157
    %v480 = vunpack.c.h.b16 %v157
    %v481 = vunpack.c.l.b16 %v158
    %v482 = vunpack.c.h.b16 %v158
    %v483 = vunpack.c.l.b16 %v159
    %v484 = vunpack.c.h.b16 %v159
    %v485 = vunpack.c.l.b16 %v160
    %v486 = vunpack.c.h.b16 %v160
    %v487 = vunpack.c.l.b16 %v161
    %v488 = vunpack.c.h.b16 %v161
    %v489 = vunpack.c.l.b16 %v162
    %v490 = vunpack.c.h.b16 %v162
    %v491 = vunpack.c.l.b16 %v163
    %v492 = vunpack.c.h.b16 %v163
    %v493 = vunpack.c.l.b16 %v164
    %v494 = vunpack.c.h.b16 %v164
    %v495 = vpack.c.b16 %v305, %v303
    %v496 = vpack.c.b16 %v306, %v304
    %v497 = vpack.c.b16 %v309, %v307
    %v498 = vpack.c.b16 %v310, %v308
    %v499 = vpack.c.b16 %v313, %v311
    %v500 = vpack.c.b16 %v314, %v312
    %v501 = vpack.c.b16 %v317, %v315
    %v502 = vpack.c.b16 %v318, %v316
    %v503 = vpack.c.b16 %v321, %v319
    %v504 = vpack.c.b16 %v322, %v320
    %v505 = vpack.c.b16 %v325, %v323
    %v506 = vpack.c.b16 %v326, %v324
    %v507 = vpack.c.b16 %v329, %v327
    %v508 = vpack.c.b16 %v330, %v328
    %v509 = vpack.c.b16 %v333, %v331
    %v510 = vpack.c.b16 %v334, %v332
    %v511 = vpack.c.b16 %v337, %v335
    %v512 = vpack.c.b16 %v338, %v336
    %v513 = vpack.c.b16 %v341, %v339
    %v514 = vpack.c.b16 %v342, %v340
    %v515 = vpack.c.b16 %v345, %v343
    %v516 = vpack.c.b16 %v346, %v344
    %v517 = vpack.c.b16 %v349, %v347
    %v518 = vpack.c.b16 %v350, %v348
    %v519 = vpack.c.b16 %v353, %v351
    %v520 = vpack.c.b16 %v354, %v352
    %v521 = vpack.c.b16 %v357, %v355
    %v522 = vpack.c.b16 %v358, %v356
    %v523 = vpack.c.b16 %v361, %v359
    %v524 = vpack.c.b16 %v362, %v360
    %v525 = vpack.c.b16 %v365, %v363
    %v526 = vpack.c.b16 %v366, %v364
    %v527 = vpack.c.b16 %v369, %v367
    %v528 = vpack.c.b16 %v370, %v368
    %v529 = vpack.c.b16 %v373, %v371
    %v530 = vpack.c.b16 %v374, %v372
    %v531 = vpack.c.b16 %v377, %v375
    %v532 = vpack.c.b16 %v378, %v376
    %v533 = vpack.c.b16 %v381, %v379
    %v534 = vpack.c.b16 %v382, %v380
    %v535 = vpack.c.b16 %v385, %v383
    %v536 = vpack.c.b16 %v386, %v384
    %v537 = vpack.c.b16 %v389, %v387
    %v538 = vpack.c.b16 %v390, %v388
    %v539 = vpack.c.b16 %v393, %v391
    %v540 = vpack.c.b16 %v394, %v392
    %v541 = vpack.c.b16 %v397, %v395
    %v542 = vpack.c.b16 %v398, %v396
    %v543 = vpack.c.b16 %v401, %v399
    %v544 = vpack.c.b16 %v402, %v400
    %v545 = vpack.c.b16 %v405, %v403
    %v546 = vpack.c.b16 %v406, %v404
    %v547 = vpack.c.b16 %v409, %v407
    %v548 = vpack.c.b16 %v410, %v408
    %v549 = vpack.c.b16 %v413, %v411
    %v550 = vpack.c.b16 %v414, %v412
    %v551 = vpack.c.b16 %v417, %v415
    %v552 = vpack.c.b16 %v418, %v416
    %v553 = vpack.c.b16 %v421, %v419
    %v554 = vpack.c.b16 %v422, %v420
    %v555 = vpack.c.b16 %v425, %v423
    %v556 = vpack.c.b16 %v426, %v424
    %v557 = vpack.c.b16 %v429, %v427
    %v558 = vpack.c.b16 %v430, %v428
    %v559 = vpack.c.b16 %v433, %v431
    %v560 = vpack.c.b16 %v434, %v432
    %v561 = vpack.c.b16 %v437, %v435
    %v562 = vpack.c.b16 %v438, %v436
    %v563 = vpack.c.b16 %v441, %v439
    %v564 = vpack.c.b16 %v442, %v440
    %v565 = vpack.c.b16 %v445, %v443
    %v566 = vpack.c.b16 %v446, %v444
    %v567 = vpack.c.b16 %v449, %v447
    %v568 = vpack.c.b16 %v450, %v448
    %v569 = vpack.c.b16 %v453, %v451
    %v570 = vpack.c.b16 %v454, %v452
    %v571 = vpack.c.b16 %v457, %v455
    %v572 = vpack.c.b16 %v458, %v456
    %v573 = vpack.c.b16 %v461, %v459
    %v574 = vpack.c.b16 %v462, %v460
    %v575 = vpack.c.b16 %v465, %v463
    %v576 = vpack.c.b16 %v466, %v464
    %v577 = vpack.c.b16 %v469, %v467
    %v578 = vpack.c.b16 %v470, %v468
    %v579 = vpack.c.b16 %v473, %v471
    %v580 = vpack.c.b16 %v474, %v472
    %v581 = vpack.c.b16 %v477, %v475
    %v582 = vpack.c.b16 %v478, %v476
    %v583 = vpack.c.b16 %v481, %v479
    %v584 = vpack.c.b16 %v482, %v480
    %v585 = vpack.c.b16 %v485, %v483
    %v586 = vpack.c.b16 %v486, %v484
    %v587 = vpack.c.b16 %v489, %v487
    %v588 = vpack.c.b16 %v490, %v488
    %v589 = vpack.c.b16 %v493, %v491
    %v590 = vpack.c.b16 %v494, %v492
    %687 = vmatprep.subr.bf16.mxu0 %v510
    %688 = vmatpush1.bf16.msra.mxu0 %v509
    %689 = vmatprep.subr.bf16.mxu0 %v508
    %690 = vmatpush1.bf16.msra.mxu0 %v507
    %691 = vmatprep.subr.bf16.mxu0 %v506
    %692 = vmatpush1.bf16.msra.mxu0 %v505
    %693 = vmatprep.subr.bf16.mxu0 %v504
    %694 = vmatpush1.bf16.msra.mxu0 %v503
    %695 = vmatprep.subr.bf16.mxu0 %v502
    %696 = vmatpush1.bf16.msra.mxu0 %v501
    %697 = vmatprep.subr.bf16.mxu0 %v500
    %698 = vmatpush1.bf16.msra.mxu0 %v499
    %699 = vmatprep.subr.bf16.mxu0 %v498
    %700 = vmatpush1.bf16.msra.mxu0 %v497
    %701 = vmatprep.subr.bf16.mxu0 %v496
    %702 = vmatpush1.bf16.msra.mxu0 %v495
    %703 = vmatprep.subr.bf16.mxu0 %v526
    %704 = vmatpush2.bf16.msra.mxu0 %v525
    %705 = vmatprep.subr.bf16.mxu0 %v524
    %706 = vmatpush2.bf16.msra.mxu0 %v523
    %707 = vmatprep.subr.bf16.mxu0 %v522
    %708 = vmatpush2.bf16.msra.mxu0 %v521
    %709 = vmatprep.subr.bf16.mxu0 %v520
    %710 = vmatpush2.bf16.msra.mxu0 %v519
    %711 = vmatprep.subr.bf16.mxu0 %v518
    %712 = vmatpush2.bf16.msra.mxu0 %v517
    %713 = vmatprep.subr.bf16.mxu0 %v516
    %714 = vmatpush2.bf16.msra.mxu0 %v515
    %715 = vmatprep.subr.bf16.mxu0 %v514
    %716 = vmatpush2.bf16.msra.mxu0 %v513
    %717 = vmatprep.subr.bf16.mxu0 %v512
    %718 = vmatpush2.bf16.msra.mxu0 %v511
    %719 = vmatprep.mubr.bf16.mxu0 %v196
    %720 = vmatmul.mubr.bf16.gmra.mxu0 %v195
    %v721 = vpop.f32.mrf.mxu0
    %v722 = vadd.f32 %v170, %v721
    %v723 = vpop.f32.mrf.mxu0
    %v724 = vadd.f32 %v174, %v723
    %v725 = vpop.f32.mrf.mxu0
    %v726 = vadd.f32 %v170, %v725
    %v727 = vpop.f32.mrf.mxu0
    %v728 = vadd.f32 %v174, %v727
    %729 = vdwg.mxu0
    %730 = vmatprep.subr.bf16.mxu0 %v542
    %731 = vmatpush1.bf16.msra.mxu0 %v541
    %732 = vmatprep.subr.bf16.mxu0 %v540
    %733 = vmatpush1.bf16.msra.mxu0 %v539
    %734 = vmatprep.subr.bf16.mxu0 %v538
    %735 = vmatpush1.bf16.msra.mxu0 %v537
    %736 = vmatprep.subr.bf16.mxu0 %v536
    %737 = vmatpush1.bf16.msra.mxu0 %v535
    %738 = vmatprep.subr.bf16.mxu0 %v534
    %739 = vmatpush1.bf16.msra.mxu0 %v533
    %740 = vmatprep.subr.bf16.mxu0 %v532
    %741 = vmatpush1.bf16.msra.mxu0 %v531
    %742 = vmatprep.subr.bf16.mxu0 %v530
    %743 = vmatpush1.bf16.msra.mxu0 %v529
    %744 = vmatprep.subr.bf16.mxu0 %v528
    %745 = vmatpush1.bf16.msra.mxu0 %v527
    %746 = vmatprep.subr.bf16.mxu0 %v558
    %747 = vmatpush2.bf16.msra.mxu0 %v557
    %748 = vmatprep.subr.bf16.mxu0 %v556
    %749 = vmatpush2.bf16.msra.mxu0 %v555
    %750 = vmatprep.subr.bf16.mxu0 %v554
    %751 = vmatpush2.bf16.msra.mxu0 %v553
    %752 = vmatprep.subr.bf16.mxu0 %v552
    %753 = vmatpush2.bf16.msra.mxu0 %v551
    %754 = vmatprep.subr.bf16.mxu0 %v550
    %755 = vmatpush2.bf16.msra.mxu0 %v549
    %756 = vmatprep.subr.bf16.mxu0 %v548
    %757 = vmatpush2.bf16.msra.mxu0 %v547
    %758 = vmatprep.subr.bf16.mxu0 %v546
    %759 = vmatpush2.bf16.msra.mxu0 %v545
    %760 = vmatprep.subr.bf16.mxu0 %v544
    %761 = vmatpush2.bf16.msra.mxu0 %v543
    %762 = vmatprep.mubr.bf16.mxu0 %v198
    %763 = vmatmul.mubr.bf16.gmra.mxu0 %v197
    %v764 = vpop.f32.mrf.mxu0
    %v765 = vadd.f32 %v722, %v764
    %v766 = vpop.f32.mrf.mxu0
    %v767 = vadd.f32 %v724, %v766
    %v768 = vpop.f32.mrf.mxu0
    %v769 = vadd.f32 %v726, %v768
    %v770 = vpop.f32.mrf.mxu0
    %v771 = vadd.f32 %v728, %v770
    %772 = vdwg.mxu0
    %773 = vmatprep.subr.bf16.mxu0 %v574
    %774 = vmatpush1.bf16.msra.mxu0 %v573
    %775 = vmatprep.subr.bf16.mxu0 %v572
    %776 = vmatpush1.bf16.msra.mxu0 %v571
    %777 = vmatprep.subr.bf16.mxu0 %v570
    %778 = vmatpush1.bf16.msra.mxu0 %v569
    %779 = vmatprep.subr.bf16.mxu0 %v568
    %780 = vmatpush1.bf16.msra.mxu0 %v567
    %781 = vmatprep.subr.bf16.mxu0 %v566
    %782 = vmatpush1.bf16.msra.mxu0 %v565
    %783 = vmatprep.subr.bf16.mxu0 %v564
    %784 = vmatpush1.bf16.msra.mxu0 %v563
    %785 = vmatprep.subr.bf16.mxu0 %v562
    %786 = vmatpush1.bf16.msra.mxu0 %v561
    %787 = vmatprep.subr.bf16.mxu0 %v560
    %788 = vmatpush1.bf16.msra.mxu0 %v559
    %789 = vmatprep.subr.bf16.mxu0 %v590
    %790 = vmatpush2.bf16.msra.mxu0 %v589
    %791 = vmatprep.subr.bf16.mxu0 %v588
    %792 = vmatpush2.bf16.msra.mxu0 %v587
    %793 = vmatprep.subr.bf16.mxu0 %v586
    %794 = vmatpush2.bf16.msra.mxu0 %v585
    %795 = vmatprep.subr.bf16.mxu0 %v584
    %796 = vmatpush2.bf16.msra.mxu0 %v583
    %797 = vmatprep.subr.bf16.mxu0 %v582
    %798 = vmatpush2.bf16.msra.mxu0 %v581
    %799 = vmatprep.subr.bf16.mxu0 %v580
    %800 = vmatpush2.bf16.msra.mxu0 %v579
    %801 = vmatprep.subr.bf16.mxu0 %v578
    %802 = vmatpush2.bf16.msra.mxu0 %v577
    %803 = vmatprep.subr.bf16.mxu0 %v576
    %804 = vmatpush2.bf16.msra.mxu0 %v575
    %805 = vmatprep.mubr.bf16.mxu0 %v200
    %806 = vmatmul.mubr.bf16.gmra.mxu0 %v199
    %v807 = vpop.f32.mrf.mxu0
    %v808 = vadd.f32 %v765, %v807
    %v809 = vpop.f32.mrf.mxu0
    %v810 = vadd.f32 %v767, %v809
    %v811 = vpop.f32.mrf.mxu0
    %v812 = vadd.f32 %v769, %v811
    %v813 = vpop.f32.mrf.mxu0
    %v814 = vadd.f32 %v771, %v813
    %815 = vdwg.mxu0
    %v816 = vmax.f32 %v808, 0.0
    %v817 = vmax.f32 %v810, 0.0
    %v818 = vmax.f32 %v812, 0.0
    %v819 = vmax.f32 %v814, 0.0
    %v820 = vpack.c.bf16 %v818, %v816
    %v821 = vpack.c.bf16 %v819, %v817
    %v822 = vld [vmem:[#allocation7] sm:$0xf]
    %v823 = vld [vmem:[#allocation7 + $0x4] sm:$0xf]
    %v824 = vld [vmem:[#allocation7 + $0x8] sm:$0xf]
    %v825 = vld [vmem:[#allocation7 + $0xc] sm:$0xf]
    %v826 = vld [vmem:[#allocation7 + $0x10] sm:$0xf]
    %v827 = vld [vmem:[#allocation7 + $0x14] sm:$0xf]
    %v828 = vld [vmem:[#allocation7 + $0x18] sm:$0xf]
    %v829 = vld [vmem:[#allocation7 + $0x1c] sm:$0xf]
    %v830 = vld [vmem:[#allocation7 + $0x20] sm:$0xf]
    %v831 = vld [vmem:[#allocation7 + $0x24] sm:$0xf]
    %v832 = vld [vmem:[#allocation7 + $0x28] sm:$0xf]
    %v833 = vld [vmem:[#allocation7 + $0x2c] sm:$0xf]
    %v834 = vld [vmem:[#allocation7 + $0x30] sm:$0xf]
    %v835 = vld [vmem:[#allocation7 + $0x34] sm:$0xf]
    %v836 = vld [vmem:[#allocation7 + $0x38] sm:$0xf]
    %v837 = vld [vmem:[#allocation7 + $0x3c] sm:$0xf]
    %v838 = vld [vmem:[#allocation7 + $0x40] sm:$0xf]
    %v839 = vld [vmem:[#allocation7 + $0x44] sm:$0xf]
    %v840 = vld [vmem:[#allocation7 + $0x48] sm:$0xf]
    %v841 = vld [vmem:[#allocation7 + $0x4c] sm:$0xf]
    %v842 = vld [vmem:[#allocation7 + $0x50] sm:$0xf]
    %v843 = vld [vmem:[#allocation7 + $0x54] sm:$0xf]
    %v844 = vld [vmem:[#allocation7 + $0x58] sm:$0xf]
    %v845 = vld [vmem:[#allocation7 + $0x5c] sm:$0xf]
    %v846 = vld [vmem:[#allocation7 + $0x60] sm:$0xf]
    %v847 = vld [vmem:[#allocation7 + $0x64] sm:$0xf]
    %v848 = vld [vmem:[#allocation7 + $0x68] sm:$0xf]
    %v849 = vld [vmem:[#allocation7 + $0x6c] sm:$0xf]
    %v850 = vld [vmem:[#allocation7 + $0x70] sm:$0xf]
    %v851 = vld [vmem:[#allocation7 + $0x74] sm:$0xf]
    %v852 = vld [vmem:[#allocation7 + $0x78] sm:$0xf]
    %v853 = vld [vmem:[#allocation7 + $0x7c] sm:$0xf]
    %v854 = vld [vmem:[%s4] sm:$0x1]
    %v856 = vlaneseq
    %v857 = vshrl.u32 %v856, 7
    %v858 = vsub.s32 0, %v857
    %v859 = vrot.slane %v854, %v858
    %v893 = vunpack.c.l.b16 %v822
    %v894 = vunpack.c.l.b16 %v823
    %v895 = vunpack.c.l.b16 %v824
    %v896 = vunpack.c.l.b16 %v825
    %v897 = vunpack.c.l.b16 %v826
    %v898 = vunpack.c.l.b16 %v827
    %v899 = vunpack.c.l.b16 %v828
    %v900 = vunpack.c.l.b16 %v829
    %v901 = vunpack.c.l.b16 %v830
    %v902 = vunpack.c.l.b16 %v831
    %v903 = vunpack.c.l.b16 %v832
    %v904 = vunpack.c.l.b16 %v833
    %v905 = vunpack.c.l.b16 %v834
    %v906 = vunpack.c.l.b16 %v835
    %v907 = vunpack.c.l.b16 %v836
    %v908 = vunpack.c.l.b16 %v837
    %v909 = vunpack.c.l.b16 %v838
    %v910 = vunpack.c.l.b16 %v839
    %v911 = vunpack.c.l.b16 %v840
    %v912 = vunpack.c.l.b16 %v841
    %v913 = vunpack.c.l.b16 %v842
    %v914 = vunpack.c.l.b16 %v843
    %v915 = vunpack.c.l.b16 %v844
    %v916 = vunpack.c.l.b16 %v845
    %v917 = vunpack.c.l.b16 %v846
    %v918 = vunpack.c.l.b16 %v847
    %v919 = vunpack.c.l.b16 %v848
    %v920 = vunpack.c.l.b16 %v849
    %v921 = vunpack.c.l.b16 %v850
    %v922 = vunpack.c.l.b16 %v851
    %v923 = vunpack.c.l.b16 %v852
    %v924 = vunpack.c.l.b16 %v853
    %v925 = vpack.c.b16 %v894, %v893
    %v926 = vpack.c.b16 %v896, %v895
    %v927 = vpack.c.b16 %v898, %v897
    %v928 = vpack.c.b16 %v900, %v899
    %v929 = vpack.c.b16 %v902, %v901
    %v930 = vpack.c.b16 %v904, %v903
    %v931 = vpack.c.b16 %v906, %v905
    %v932 = vpack.c.b16 %v908, %v907
    %v933 = vpack.c.b16 %v910, %v909
    %v934 = vpack.c.b16 %v912, %v911
    %v935 = vpack.c.b16 %v914, %v913
    %v936 = vpack.c.b16 %v916, %v915
    %v937 = vpack.c.b16 %v918, %v917
    %v938 = vpack.c.b16 %v920, %v919
    %v939 = vpack.c.b16 %v922, %v921
    %v940 = vpack.c.b16 %v924, %v923
    %957 = vmatprep.subr.bf16.mxu0 0
    %958 = vmatpush1.bf16.msra.mxu0 %v932
    %959 = vmatprep.subr.bf16.mxu0 0
    %960 = vmatpush1.bf16.msra.mxu0 %v931
    %961 = vmatprep.subr.bf16.mxu0 0
    %962 = vmatpush1.bf16.msra.mxu0 %v930
    %963 = vmatprep.subr.bf16.mxu0 0
    %964 = vmatpush1.bf16.msra.mxu0 %v929
    %965 = vmatprep.subr.bf16.mxu0 0
    %966 = vmatpush1.bf16.msra.mxu0 %v928
    %967 = vmatprep.subr.bf16.mxu0 0
    %968 = vmatpush1.bf16.msra.mxu0 %v927
    %969 = vmatprep.subr.bf16.mxu0 0
    %970 = vmatpush1.bf16.msra.mxu0 %v926
    %971 = vmatprep.subr.bf16.mxu0 0
    %972 = vmatpush1.bf16.msra.mxu0 %v925
    %973 = vmatprep.subr.bf16.mxu0 0
    %974 = vmatpush2.bf16.msra.mxu0 %v940
    %975 = vmatprep.subr.bf16.mxu0 0
    %976 = vmatpush2.bf16.msra.mxu0 %v939
    %977 = vmatprep.subr.bf16.mxu0 0
    %978 = vmatpush2.bf16.msra.mxu0 %v938
    %979 = vmatprep.subr.bf16.mxu0 0
    %980 = vmatpush2.bf16.msra.mxu0 %v937
    %981 = vmatprep.subr.bf16.mxu0 0
    %982 = vmatpush2.bf16.msra.mxu0 %v936
    %983 = vmatprep.subr.bf16.mxu0 0
    %984 = vmatpush2.bf16.msra.mxu0 %v935
    %985 = vmatprep.subr.bf16.mxu0 0
    %986 = vmatpush2.bf16.msra.mxu0 %v934
    %987 = vmatprep.subr.bf16.mxu0 0
    %988 = vmatpush2.bf16.msra.mxu0 %v933
    %989 = vmatprep.mubr.bf16.mxu0 %v821
    %990 = vmatmul.mubr.bf16.gmra.mxu0 %v820
    %v991 = vpop.f32.mrf.mxu0
    %v992 = vadd.f32 %v859, %v991
    %v993 = vpop.f32.mrf.mxu0
    %v994 = vpop.f32.mrf.mxu0
    %v995 = vadd.f32 %v859, %v994
    %v996 = vpop.f32.mrf.mxu0
    %997 = vdwg.mxu0
    %998 = vst [vmem:[#allocation8] sm:$0xff] %v992
    %999 = vst [vmem:[#allocation8 + $0x8] sm:$0xff] %v995
    // Predicated region
    $region34: #{tpu_custom_call.1} parent=1 // pred_check
      _
    $region35: #{tpu_custom_call.1} parent=1 // pred_check_branch
      %1001 = sbr.rel (0) target = $region37
    $region36: #{tpu_custom_call.1} parent=1 // pred_region
      %s1003 = ssub.s32 256, 256
      %1004 = vsyncadd [#allocation4], %s1003
      %s1005 = sshll.u32 [#allocation8], 4
      %s1006 = int_to_ptr.vmem [resolvable:$true] %s1005
      %1011 = dma.vmem_to_hbm [thread:$0]  %s1006, 256, %s5, [#allocation4], 128, 128, 8
    $region37: #{tpu_custom_call.1} parent=1 // pred_fallthru
      _
    // Predicated region
    $region38: #{tpu_custom_call.1} parent=1 // pred_check
      _
    $region39: #{tpu_custom_call.1} parent=1 // pred_check_branch
      %1013 = sbr.rel (0) target = $region41
    $region40: #{tpu_custom_call.1} parent=1 // pred_region
      %1014 = dma.done [#allocation4], 256
    $region41: #{tpu_custom_call.1} parent=1 // pred_fallthru
      _
    %1015 = vsyncpa [#allocation3], 1
    %1016 = vsyncpa [#allocation6], 1
    %1017 = vsyncpa [#allocation4], 1

// kernel: tpu_custom_call.1
$region0: #{tpu_custom_call.1}
  #allocation0 [shape = 'u32[]', space=smem, size = 0x4, offset = 0x4, fixed_abs, tag = 'smem constant byte address 0x4 - core index']
  #allocation1 [shape = 'u32[144,128]{1,0:T(1,128)}', space=vmem, size = 0x12000, scoped, tag = 'internal scratch']
  %s0 = inlined_call_operand.hbm [shape: bf16[16,768], index: 0, kind: input, shape index: {}]
  %s1 = inlined_call_operand.hbm [shape: bf16[768,256], index: 1, kind: input, shape index: {}]
  %s2 = inlined_call_operand.vmem [shape: f32[1,256], index: 2, kind: input, shape index: {}]
  %s3 = inlined_call_operand.hbm [shape: bf16[256,128], index: 3, kind: input, shape index: {}]
  %s4 = inlined_call_operand.vmem [shape: f32[1,128], index: 4, kind: input, shape index: {}]
  %s5 = inlined_call_operand.hbm [shape: f32[16,128], index: 5, kind: output, shape index: {}]
  %s6 = sld [smem:[#allocation0]]
  $region42: #{tpu_custom_call.1} parent=0
    _
  %s8 = ssub.s32 1, %s6
  %s9 = scalar_select 0, %s8, %s6
  $region1: #{tpu_custom_call.1} parent=0
    #allocation2 [shape = 'u8[24576]{0}', space=vmem, size = 0x6000, scoped, tag = 'input window, operand 0, single buffered']
    #allocation3 [shape = 's32[1]{0}', space=sflag, size = 0x4, scoped, tag = 'scoped memory for tpu_custom_call.1']
    #allocation4 [shape = 's32[1]{0}', space=sflag, size = 0x4, scoped, tag = 'scoped memory for tpu_custom_call.1']
    #allocation5 [shape = 'u8[393216]{0}', space=vmem, size = 0x60000, scoped, tag = 'input window, operand 1, single buffered']
    #allocation6 [shape = 's32[1]{0}', space=sflag, size = 0x4, scoped, tag = 'scoped memory for tpu_custom_call.1']
    #allocation7 [shape = 'u8[65536]{0}', space=vmem, size = 0x10000, scoped, tag = 'input window, operand 3, single buffered']
    #allocation8 [shape = 'u8[8192]{0}', space=vmem, size = 0x2000, scoped, tag = 'output window, operand 0, single buffered']
    %10 = vsyncpa [#allocation3], 0
    %11 = vsyncpa [#allocation6], 0
    %12 = vsyncpa [#allocation4], 0
    // Predicated region
    $region2: #{tpu_custom_call.1} parent=1 // pred_check
      _
    $region3: #{tpu_custom_call.1} parent=1 // pred_check_branch
      %14 = sbr.rel (0) target = $region5
    $region4: #{tpu_custom_call.1} parent=1 // pred_region
      %s16 = ssub.s32 768, 768
      %17 = vsyncadd [#allocation3], %s16
      %s18 = sshll.u32 [#allocation2], 4
      %s19 = int_to_ptr.vmem [resolvable:$true] %s18
      %24 = dma.hbm_to_vmem [thread:$0]  %s0, 768, %s19, [#allocation3], 384, 384, 24
    $region5: #{tpu_custom_call.1} parent=1 // pred_fallthru
      _
    // Predicated region
    $region6: #{tpu_custom_call.1} parent=1 // pred_check
      _
    $region7: #{tpu_custom_call.1} parent=1 // pred_check_branch
      %26 = sbr.rel (0) target = $region9
    $region8: #{tpu_custom_call.1} parent=1 // pred_region
      %s28 = ssub.s32 12288, 12288
      %29 = vsyncadd [#allocation6], %s28
      %s30 = sshll.u32 [#allocation5], 4
      %s31 = int_to_ptr.vmem [resolvable:$true] %s30
      %36 = dma.hbm_to_vmem [thread:$0]  %s1, 12288, %s31, [#allocation6], 128, 128, 8
    $region9: #{tpu_custom_call.1} parent=1 // pred_fallthru
      _
    // Predicated region
    $region10: #{tpu_custom_call.1} parent=1 // pred_check
      _
    $region11: #{tpu_custom_call.1} parent=1 // pred_check_branch
      %38 = sbr.rel (0) target = $region13
    $region12: #{tpu_custom_call.1} parent=1 // pred_region
      _
    $region13: #{tpu_custom_call.1} parent=1 // pred_fallthru
      _
    // Predicated region
    $region14: #{tpu_custom_call.1} parent=1 // pred_check
      _
    $region15: #{tpu_custom_call.1} parent=1 // pred_check_branch
      %40 = sbr.rel (0) target = $region17
    $region16: #{tpu_custom_call.1} parent=1 // pred_region
      %s42 = ssub.s32 2048, 2048
      %43 = vsyncadd [#allocation6], %s42
      %s44 = sshll.u32 [#allocation7], 4
      %s45 = int_to_ptr.vmem [resolvable:$true] %s44
      %50 = dma.hbm_to_vmem [thread:$0]  %s3, 2048, %s45, [#allocation6], 64, 64, 4
    $region17: #{tpu_custom_call.1} parent=1 // pred_fallthru
      _
    // Predicated region
    $region18: #{tpu_custom_call.1} parent=1 // pred_check
      _
    $region19: #{tpu_custom_call.1} parent=1 // pred_check_branch
      %52 = sbr.rel (0) target = $region21
    $region20: #{tpu_custom_call.1} parent=1 // pred_region
      _
    $region21: #{tpu_custom_call.1} parent=1 // pred_fallthru
      _
    // Predicated region
    $region22: #{tpu_custom_call.1} parent=1 // pred_check
      _
    $region23: #{tpu_custom_call.1} parent=1 // pred_check_branch
      %54 = sbr.rel (0) target = $region25
    $region24: #{tpu_custom_call.1} parent=1 // pred_region
      %55 = dma.done [#allocation3], 768
    $region25: #{tpu_custom_call.1} parent=1 // pred_fallthru
      _
    // Predicated region
    $region26: #{tpu_custom_call.1} parent=1 // pred_check
      _
    $region27: #{tpu_custom_call.1} parent=1 // pred_check_branch
      %57 = sbr.rel (0) target = $region29
    $region28: #{tpu_custom_call.1} parent=1 // pred_region
      %58 = dma.done [#allocation6], 12288
    $region29: #{tpu_custom_call.1} parent=1 // pred_fallthru
      _
    // Predicated region
    $region30: #{tpu_custom_call.1} parent=1 // pred_check
      _
    $region31: #{tpu_custom_call.1} parent=1 // pred_check_branch
      %60 = sbr.rel (0) target = $region33
    $region32: #{tpu_custom_call.1} parent=1 // pred_region
      %61 = dma.done [#allocation6], 2048
    $region33: #{tpu_custom_call.1} parent=1 // pred_fallthru
      _
    %v63 = vld [vmem:[#allocation2] sm:$0xff]
    %v64 = vld [vmem:[#allocation2 + $0x8] sm:$0xff]
    %v65 = vld [vmem:[#allocation2 + $0x10] sm:$0xff]
    %v66 = vld [vmem:[#allocation2 + $0x18] sm:$0xff]
    %v67 = vld [vmem:[#allocation2 + $0x20] sm:$0xff]
    %v68 = vld [vmem:[#allocation2 + $0x28] sm:$0xff]
    %v69 = vld [vmem:[#allocation5] sm:$0xff]
    %v70 = vld [vmem:[#allocation5 + $0x8] sm:$0xff]
    %v71 = vld [vmem:[#allocation5 + $0x10] sm:$0xff]
    %v72 = vld [vmem:[#allocation5 + $0x18] sm:$0xff]
    %v73 = vld [vmem:[#allocation5 + $0x20] sm:$0xff]
    %v74 = vld [vmem:[#allocation5 + $0x28] sm:$0xff]
    %v75 = vld [vmem:[#allocation5 + $0x30] sm:$0xff]
    %v76 = vld [vmem:[#allocation5 + $0x38] sm:$0xff]
    %v77 = vld [vmem:[#allocation5 + $0x40] sm:$0xff]
    %v78 = vld [vmem:[#allocation5 + $0x48] sm:$0xff]
    %v79 = vld [vmem:[#allocation5 + $0x50] sm:$0xff]
    %v80 = vld [vmem:[#allocation5 + $0x58] sm:$0xff]
    %v81 = vld [vmem:[#allocation5 + $0x60] sm:$0xff]
    %v82 = vld [vmem:[#allocation5 + $0x68] sm:$0xff]
    %v83 = vld [vmem:[#allocation5 + $0x70] sm:$0xff]
    %v84 = vld [vmem:[#allocation5 + $0x78] sm:$0xff]
    %v85 = vld [vmem:[#allocation5 + $0x80] sm:$0xff]
    %v86 = vld [vmem:[#allocation5 + $0x88] sm:$0xff]
    %v87 = vld [vmem:[#allocation5 + $0x90] sm:$0xff]
    %v88 = vld [vmem:[#allocation5 + $0x98] sm:$0xff]
    %v89 = vld [vmem:[#allocation5 + $0xa0] sm:$0xff]
    %v90 = vld [vmem:[#allocation5 + $0xa8] sm:$0xff]
    %v91 = vld [vmem:[#allocation5 + $0xb0] sm:$0xff]
    %v92 = vld [vmem:[#allocation5 + $0xb8] sm:$0xff]
    %v93 = vld [vmem:[#allocation5 + $0xc0] sm:$0xff]
    %v94 = vld [vmem:[#allocation5 + $0xc8] sm:$0xff]
    %v95 = vld [vmem:[#allocation5 + $0xd0] sm:$0xff]
    %v96 = vld [vmem:[#allocation5 + $0xd8] sm:$0xff]
    %v97 = vld [vmem:[#allocation5 + $0xe0] sm:$0xff]
    %v98 = vld [vmem:[#allocation5 + $0xe8] sm:$0xff]
    %v99 = vld [vmem:[#allocation5 + $0xf0] sm:$0xff]
    %v100 = vld [vmem:[#allocation5 + $0xf8] sm:$0xff]
    %v101 = vld [vmem:[#allocation5 + $0x100] sm:$0xff]
    %v102 = vld [vmem:[#allocation5 + $0x108] sm:$0xff]
    %v103 = vld [vmem:[#allocation5 + $0x110] sm:$0xff]
    %v104 = vld [vmem:[#allocation5 + $0x118] sm:$0xff]
    %v105 = vld [vmem:[#allocation5 + $0x120] sm:$0xff]
    %v106 = vld [vmem:[#allocation5 + $0x128] sm:$0xff]
    %v107 = vld [vmem:[#allocation5 + $0x130] sm:$0xff]
    %v108 = vld [vmem:[#allocation5 + $0x138] sm:$0xff]
    %v109 = vld [vmem:[#allocation5 + $0x140] sm:$0xff]
    %v110 = vld [vmem:[#allocation5 + $0x148] sm:$0xff]
    %v111 = vld [vmem:[#allocation5 + $0x150] sm:$0xff]
    %v112 = vld [vmem:[#allocation5 + $0x158] sm:$0xff]
    %v113 = vld [vmem:[#allocation5 + $0x160] sm:$0xff]
    %v114 = vld [vmem:[#allocation5 + $0x168] sm:$0xff]
    %v115 = vld [vmem:[#allocation5 + $0x170] sm:$0xff]
    %v116 = vld [vmem:[#allocation5 + $0x178] sm:$0xff]
    %v117 = vld [vmem:[#allocation5 + $0x180] sm:$0xff]
    %v118 = vld [vmem:[#allocation5 + $0x188] sm:$0xff]
    %v119 = vld [vmem:[#allocation5 + $0x190] sm:$0xff]
    %v120 = vld [vmem:[#allocation5 + $0x198] sm:$0xff]
    %v121 = vld [vmem:[#allocation5 + $0x1a0] sm:$0xff]
    %v122 = vld [vmem:[#allocation5 + $0x1a8] sm:$0xff]
    %v123 = vld [vmem:[#allocation5 + $0x1b0] sm:$0xff]
    %v124 = vld [vmem:[#allocation5 + $0x1b8] sm:$0xff]
    %v125 = vld [vmem:[#allocation5 + $0x1c0] sm:$0xff]
    %v126 = vld [vmem:[#allocation5 + $0x1c8] sm:$0xff]
    %v127 = vld [vmem:[#allocation5 + $0x1d0] sm:$0xff]
    %v128 = vld [vmem:[#allocation5 + $0x1d8] sm:$0xff]
    %v129 = vld [vmem:[#allocation5 + $0x1e0] sm:$0xff]
    %v130 = vld [vmem:[#allocation5 + $0x1e8] sm:$0xff]
    %v131 = vld [vmem:[#allocation5 + $0x1f0] sm:$0xff]
    %v132 = vld [vmem:[#allocation5 + $0x1f8] sm:$0xff]
    %v133 = vld [vmem:[#allocation5 + $0x200] sm:$0xff]
    %v134 = vld [vmem:[#allocation5 + $0x208] sm:$0xff]
    %v135 = vld [vmem:[#allocation5 + $0x210] sm:$0xff]
    %v136 = vld [vmem:[#allocation5 + $0x218] sm:$0xff]
    %v137 = vld [vmem:[#allocation5 + $0x220] sm:$0xff]
    %v138 = vld [vmem:[#allocation5 + $0x228] sm:$0xff]
    %v139 = vld [vmem:[#allocation5 + $0x230] sm:$0xff]
    %v140 = vld [vmem:[#allocation5 + $0x238] sm:$0xff]
    %v141 = vld [vmem:[#allocation5 + $0x240] sm:$0xff]
    %v142 = vld [vmem:[#allocation5 + $0x248] sm:$0xff]
    %v143 = vld [vmem:[#allocation5 + $0x250] sm:$0xff]
    %v144 = vld [vmem:[#allocation5 + $0x258] sm:$0xff]
    %v145 = vld [vmem:[#allocation5 + $0x260] sm:$0xff]
    %v146 = vld [vmem:[#allocation5 + $0x268] sm:$0xff]
    %v147 = vld [vmem:[#allocation5 + $0x270] sm:$0xff]
    %v148 = vld [vmem:[#allocation5 + $0x278] sm:$0xff]
    %v149 = vld [vmem:[#allocation5 + $0x280] sm:$0xff]
    %v150 = vld [vmem:[#allocation5 + $0x288] sm:$0xff]
    %v151 = vld [vmem:[#allocation5 + $0x290] sm:$0xff]
    %v152 = vld [vmem:[#allocation5 + $0x298] sm:$0xff]
    %v153 = vld [vmem:[#allocation5 + $0x2a0] sm:$0xff]
    %v154 = vld [vmem:[#allocation5 + $0x2a8] sm:$0xff]
    %v155 = vld [vmem:[#allocation5 + $0x2b0] sm:$0xff]
    %v156 = vld [vmem:[#allocation5 + $0x2b8] sm:$0xff]
    %v157 = vld [vmem:[#allocation5 + $0x2c0] sm:$0xff]
    %v158 = vld [vmem:[#allocation5 + $0x2c8] sm:$0xff]
    %v159 = vld [vmem:[#allocation5 + $0x2d0] sm:$0xff]
    %v160 = vld [vmem:[#allocation5 + $0x2d8] sm:$0xff]
    %v161 = vld [vmem:[#allocation5 + $0x2e0] sm:$0xff]
    %v162 = vld [vmem:[#allocation5 + $0x2e8] sm:$0xff]
    %v163 = vld [vmem:[#allocation5 + $0x2f0] sm:$0xff]
    %v164 = vld [vmem:[#allocation5 + $0x2f8] sm:$0xff]
    %v165 = vld [vmem:[%s2] sm:$0x3]
    %v167 = vlaneseq
    %v168 = vshrl.u32 %v167, 7
    %v169 = vsub.s32 0, %v168
    %v170 = vrot.slane %v165, %v169
    %v171 = vlaneseq
    %v172 = vshrl.u32 %v171, 7
    %v173 = vsub.s32 1, %v172
    %v174 = vrot.slane %v165, %v173
    %v183 = vunpack.c.l.b16 %v63
    %v184 = vunpack.c.h.b16 %v63
    %v185 = vunpack.c.l.b16 %v64
    %v186 = vunpack.c.h.b16 %v64
    %v187 = vunpack.c.l.b16 %v65
    %v188 = vunpack.c.h.b16 %v65
    %v189 = vunpack.c.l.b16 %v66
    %v190 = vunpack.c.h.b16 %v66
    %v191 = vunpack.c.l.b16 %v67
    %v192 = vunpack.c.h.b16 %v67
    %v193 = vunpack.c.l.b16 %v68
    %v194 = vunpack.c.h.b16 %v68
    %v195 = vpack.c.b16 %v189, %v183
    %v196 = vpack.c.b16 %v190, %v184
    %v197 = vpack.c.b16 %v191, %v185
    %v198 = vpack.c.b16 %v192, %v186
    %v199 = vpack.c.b16 %v193, %v187
    %v200 = vpack.c.b16 %v194, %v188
    %v303 = vunpack.c.l.b16 %v69
    %v304 = vunpack.c.h.b16 %v69
    %v305 = vunpack.c.l.b16 %v70
    %v306 = vunpack.c.h.b16 %v70
    %v307 = vunpack.c.l.b16 %v71
    %v308 = vunpack.c.h.b16 %v71
    %v309 = vunpack.c.l.b16 %v72
    %v310 = vunpack.c.h.b16 %v72
    %v311 = vunpack.c.l.b16 %v73
    %v312 = vunpack.c.h.b16 %v73
    %v313 = vunpack.c.l.b16 %v74
    %v314 = vunpack.c.h.b16 %v74
    %v315 = vunpack.c.l.b16 %v75
    %v316 = vunpack.c.h.b16 %v75
    %v317 = vunpack.c.l.b16 %v76
    %v318 = vunpack.c.h.b16 %v76
    %v319 = vunpack.c.l.b16 %v77
    %v320 = vunpack.c.h.b16 %v77
    %v321 = vunpack.c.l.b16 %v78
    %v322 = vunpack.c.h.b16 %v78
    %v323 = vunpack.c.l.b16 %v79
    %v324 = vunpack.c.h.b16 %v79
    %v325 = vunpack.c.l.b16 %v80
    %v326 = vunpack.c.h.b16 %v80
    %v327 = vunpack.c.l.b16 %v81
    %v328 = vunpack.c.h.b16 %v81
    %v329 = vunpack.c.l.b16 %v82
    %v330 = vunpack.c.h.b16 %v82
    %v331 = vunpack.c.l.b16 %v83
    %v332 = vunpack.c.h.b16 %v83
    %v333 = vunpack.c.l.b16 %v84
    %v334 = vunpack.c.h.b16 %v84
    %v335 = vunpack.c.l.b16 %v85
    %v336 = vunpack.c.h.b16 %v85
    %v337 = vunpack.c.l.b16 %v86
    %v338 = vunpack.c.h.b16 %v86
    %v339 = vunpack.c.l.b16 %v87
    %v340 = vunpack.c.h.b16 %v87
    %v341 = vunpack.c.l.b16 %v88
    %v342 = vunpack.c.h.b16 %v88
    %v343 = vunpack.c.l.b16 %v89
    %v344 = vunpack.c.h.b16 %v89
    %v345 = vunpack.c.l.b16 %v90
    %v346 = vunpack.c.h.b16 %v90
    %v347 = vunpack.c.l.b16 %v91
    %v348 = vunpack.c.h.b16 %v91
    %v349 = vunpack.c.l.b16 %v92
    %v350 = vunpack.c.h.b16 %v92
    %v351 = vunpack.c.l.b16 %v93
    %v352 = vunpack.c.h.b16 %v93
    %v353 = vunpack.c.l.b16 %v94
    %v354 = vunpack.c.h.b16 %v94
    %v355 = vunpack.c.l.b16 %v95
    %v356 = vunpack.c.h.b16 %v95
    %v357 = vunpack.c.l.b16 %v96
    %v358 = vunpack.c.h.b16 %v96
    %v359 = vunpack.c.l.b16 %v97
    %v360 = vunpack.c.h.b16 %v97
    %v361 = vunpack.c.l.b16 %v98
    %v362 = vunpack.c.h.b16 %v98
    %v363 = vunpack.c.l.b16 %v99
    %v364 = vunpack.c.h.b16 %v99
    %v365 = vunpack.c.l.b16 %v100
    %v366 = vunpack.c.h.b16 %v100
    %v367 = vunpack.c.l.b16 %v101
    %v368 = vunpack.c.h.b16 %v101
    %v369 = vunpack.c.l.b16 %v102
    %v370 = vunpack.c.h.b16 %v102
    %v371 = vunpack.c.l.b16 %v103
    %v372 = vunpack.c.h.b16 %v103
    %v373 = vunpack.c.l.b16 %v104
    %v374 = vunpack.c.h.b16 %v104
    %v375 = vunpack.c.l.b16 %v105
    %v376 = vunpack.c.h.b16 %v105
    %v377 = vunpack.c.l.b16 %v106
    %v378 = vunpack.c.h.b16 %v106
    %v379 = vunpack.c.l.b16 %v107
    %v380 = vunpack.c.h.b16 %v107
    %v381 = vunpack.c.l.b16 %v108
    %v382 = vunpack.c.h.b16 %v108
    %v383 = vunpack.c.l.b16 %v109
    %v384 = vunpack.c.h.b16 %v109
    %v385 = vunpack.c.l.b16 %v110
    %v386 = vunpack.c.h.b16 %v110
    %v387 = vunpack.c.l.b16 %v111
    %v388 = vunpack.c.h.b16 %v111
    %v389 = vunpack.c.l.b16 %v112
    %v390 = vunpack.c.h.b16 %v112
    %v391 = vunpack.c.l.b16 %v113
    %v392 = vunpack.c.h.b16 %v113
    %v393 = vunpack.c.l.b16 %v114
    %v394 = vunpack.c.h.b16 %v114
    %v395 = vunpack.c.l.b16 %v115
    %v396 = vunpack.c.h.b16 %v115
    %v397 = vunpack.c.l.b16 %v116
    %v398 = vunpack.c.h.b16 %v116
    %v399 = vunpack.c.l.b16 %v117
    %v400 = vunpack.c.h.b16 %v117
    %v401 = vunpack.c.l.b16 %v118
    %v402 = vunpack.c.h.b16 %v118
    %v403 = vunpack.c.l.b16 %v119
    %v404 = vunpack.c.h.b16 %v119
    %v405 = vunpack.c.l.b16 %v120
    %v406 = vunpack.c.h.b16 %v120
    %v407 = vunpack.c.l.b16 %v121
    %v408 = vunpack.c.h.b16 %v121
    %v409 = vunpack.c.l.b16 %v122
    %v410 = vunpack.c.h.b16 %v122
    %v411 = vunpack.c.l.b16 %v123
    %v412 = vunpack.c.h.b16 %v123
    %v413 = vunpack.c.l.b16 %v124
    %v414 = vunpack.c.h.b16 %v124
    %v415 = vunpack.c.l.b16 %v125
    %v416 = vunpack.c.h.b16 %v125
    %v417 = vunpack.c.l.b16 %v126
    %v418 = vunpack.c.h.b16 %v126
    %v419 = vunpack.c.l.b16 %v127
    %v420 = vunpack.c.h.b16 %v127
    %v421 = vunpack.c.l.b16 %v128
    %v422 = vunpack.c.h.b16 %v128
    %v423 = vunpack.c.l.b16 %v129
    %v424 = vunpack.c.h.b16 %v129
    %v425 = vunpack.c.l.b16 %v130
    %v426 = vunpack.c.h.b16 %v130
    %v427 = vunpack.c.l.b16 %v131
    %v428 = vunpack.c.h.b16 %v131
    %v429 = vunpack.c.l.b16 %v132
    %v430 = vunpack.c.h.b16 %v132
    %v431 = vunpack.c.l.b16 %v133
    %v432 = vunpack.c.h.b16 %v133
    %v433 = vunpack.c.l.b16 %v134
    %v434 = vunpack.c.h.b16 %v134
    %v435 = vunpack.c.l.b16 %v135
    %v436 = vunpack.c.h.b16 %v135
    %v437 = vunpack.c.l.b16 %v136
    %v438 = vunpack.c.h.b16 %v136
    %v439 = vunpack.c.l.b16 %v137
    %v440 = vunpack.c.h.b16 %v137
    %v441 = vunpack.c.l.b16 %v138
    %v442 = vunpack.c.h.b16 %v138
    %v443 = vunpack.c.l.b16 %v139
    %v444 = vunpack.c.h.b16 %v139
    %v445 = vunpack.c.l.b16 %v140
    %v446 = vunpack.c.h.b16 %v140
    %v447 = vunpack.c.l.b16 %v141
    %v448 = vunpack.c.h.b16 %v141
    %v449 = vunpack.c.l.b16 %v142
    %v450 = vunpack.c.h.b16 %v142
    %v451 = vunpack.c.l.b16 %v143
    %v452 = vunpack.c.h.b16 %v143
    %v453 = vunpack.c.l.b16 %v144
    %v454 = vunpack.c.h.b16 %v144
    %v455 = vunpack.c.l.b16 %v145
    %v456 = vunpack.c.h.b16 %v145
    %v457 = vunpack.c.l.b16 %v146
    %v458 = vunpack.c.h.b16 %v146
    %v459 = vunpack.c.l.b16 %v147
    %v460 = vunpack.c.h.b16 %v147
    %v461 = vunpack.c.l.b16 %v148
    %v462 = vunpack.c.h.b16 %v148
    %v463 = vunpack.c.l.b16 %v149
    %v464 = vunpack.c.h.b16 %v149
    %v465 = vunpack.c.l.b16 %v150
    %v466 = vunpack.c.h.b16 %v150
    %v467 = vunpack.c.l.b16 %v151
    %v468 = vunpack.c.h.b16 %v151
    %v469 = vunpack.c.l.b16 %v152
    %v470 = vunpack.c.h.b16 %v152
    %v471 = vunpack.c.l.b16 %v153
    %v472 = vunpack.c.h.b16 %v153
    %v473 = vunpack.c.l.b16 %v154
    %v474 = vunpack.c.h.b16 %v154
    %v475 = vunpack.c.l.b16 %v155
    %v476 = vunpack.c.h.b16 %v155
    %v477 = vunpack.c.l.b16 %v156
    %v478 = vunpack.c.h.b16 %v156
    %v479 = vunpack.c.l.b16 %v157
    %v480 = vunpack.c.h.b16 %v157
    %v481 = vunpack.c.l.b16 %v158
    %v482 = vunpack.c.h.b16 %v158
    %v483 = vunpack.c.l.b16 %v159
    %v484 = vunpack.c.h.b16 %v159
    %v485 = vunpack.c.l.b16 %v160
    %v486 = vunpack.c.h.b16 %v160
    %v487 = vunpack.c.l.b16 %v161
    %v488 = vunpack.c.h.b16 %v161
    %v489 = vunpack.c.l.b16 %v162
    %v490 = vunpack.c.h.b16 %v162
    %v491 = vunpack.c.l.b16 %v163
    %v492 = vunpack.c.h.b16 %v163
    %v493 = vunpack.c.l.b16 %v164
    %v494 = vunpack.c.h.b16 %v164
    %v495 = vpack.c.b16 %v305, %v303
    %v496 = vpack.c.b16 %v306, %v304
    %v497 = vpack.c.b16 %v309, %v307
    %v498 = vpack.c.b16 %v310, %v308
    %v499 = vpack.c.b16 %v313, %v311
    %v500 = vpack.c.b16 %v314, %v312
    %v501 = vpack.c.b16 %v317, %v315
    %v502 = vpack.c.b16 %v318, %v316
    %v503 = vpack.c.b16 %v321, %v319
    %v504 = vpack.c.b16 %v322, %v320
    %v505 = vpack.c.b16 %v325, %v323
    %v506 = vpack.c.b16 %v326, %v324
    %v507 = vpack.c.b16 %v329, %v327
    %v508 = vpack.c.b16 %v330, %v328
    %v509 = vpack.c.b16 %v333, %v331
    %v510 = vpack.c.b16 %v334, %v332
    %v511 = vpack.c.b16 %v337, %v335
    %v512 = vpack.c.b16 %v338, %v336
    %v513 = vpack.c.b16 %v341, %v339
    %v514 = vpack.c.b16 %v342, %v340
    %v515 = vpack.c.b16 %v345, %v343
    %v516 = vpack.c.b16 %v346, %v344
    %v517 = vpack.c.b16 %v349, %v347
    %v518 = vpack.c.b16 %v350, %v348
    %v519 = vpack.c.b16 %v353, %v351
    %v520 = vpack.c.b16 %v354, %v352
    %v521 = vpack.c.b16 %v357, %v355
    %v522 = vpack.c.b16 %v358, %v356
    %v523 = vpack.c.b16 %v361, %v359
    %v524 = vpack.c.b16 %v362, %v360
    %v525 = vpack.c.b16 %v365, %v363
    %v526 = vpack.c.b16 %v366, %v364
    %v527 = vpack.c.b16 %v369, %v367
    %v528 = vpack.c.b16 %v370, %v368
    %v529 = vpack.c.b16 %v373, %v371
    %v530 = vpack.c.b16 %v374, %v372
    %v531 = vpack.c.b16 %v377, %v375
    %v532 = vpack.c.b16 %v378, %v376
    %v533 = vpack.c.b16 %v381, %v379
    %v534 = vpack.c.b16 %v382, %v380
    %v535 = vpack.c.b16 %v385, %v383
    %v536 = vpack.c.b16 %v386, %v384
    %v537 = vpack.c.b16 %v389, %v387
    %v538 = vpack.c.b16 %v390, %v388
    %v539 = vpack.c.b16 %v393, %v391
    %v540 = vpack.c.b16 %v394, %v392
    %v541 = vpack.c.b16 %v397, %v395
    %v542 = vpack.c.b16 %v398, %v396
    %v543 = vpack.c.b16 %v401, %v399
    %v544 = vpack.c.b16 %v402, %v400
    %v545 = vpack.c.b16 %v405, %v403
    %v546 = vpack.c.b16 %v406, %v404
    %v547 = vpack.c.b16 %v409, %v407
    %v548 = vpack.c.b16 %v410, %v408
    %v549 = vpack.c.b16 %v413, %v411
    %v550 = vpack.c.b16 %v414, %v412
    %v551 = vpack.c.b16 %v417, %v415
    %v552 = vpack.c.b16 %v418, %v416
    %v553 = vpack.c.b16 %v421, %v419
    %v554 = vpack.c.b16 %v422, %v420
    %v555 = vpack.c.b16 %v425, %v423
    %v556 = vpack.c.b16 %v426, %v424
    %v557 = vpack.c.b16 %v429, %v427
    %v558 = vpack.c.b16 %v430, %v428
    %v559 = vpack.c.b16 %v433, %v431
    %v560 = vpack.c.b16 %v434, %v432
    %v561 = vpack.c.b16 %v437, %v435
    %v562 = vpack.c.b16 %v438, %v436
    %v563 = vpack.c.b16 %v441, %v439
    %v564 = vpack.c.b16 %v442, %v440
    %v565 = vpack.c.b16 %v445, %v443
    %v566 = vpack.c.b16 %v446, %v444
    %v567 = vpack.c.b16 %v449, %v447
    %v568 = vpack.c.b16 %v450, %v448
    %v569 = vpack.c.b16 %v453, %v451
    %v570 = vpack.c.b16 %v454, %v452
    %v571 = vpack.c.b16 %v457, %v455
    %v572 = vpack.c.b16 %v458, %v456
    %v573 = vpack.c.b16 %v461, %v459
    %v574 = vpack.c.b16 %v462, %v460
    %v575 = vpack.c.b16 %v465, %v463
    %v576 = vpack.c.b16 %v466, %v464
    %v577 = vpack.c.b16 %v469, %v467
    %v578 = vpack.c.b16 %v470, %v468
    %v579 = vpack.c.b16 %v473, %v471
    %v580 = vpack.c.b16 %v474, %v472
    %v581 = vpack.c.b16 %v477, %v475
    %v582 = vpack.c.b16 %v478, %v476
    %v583 = vpack.c.b16 %v481, %v479
    %v584 = vpack.c.b16 %v482, %v480
    %v585 = vpack.c.b16 %v485, %v483
    %v586 = vpack.c.b16 %v486, %v484
    %v587 = vpack.c.b16 %v489, %v487
    %v588 = vpack.c.b16 %v490, %v488
    %v589 = vpack.c.b16 %v493, %v491
    %v590 = vpack.c.b16 %v494, %v492
    %687 = vmatprep.subr.bf16.mxu0 %v510
    %688 = vmatpush1.bf16.msra.mxu0 %v509
    %689 = vmatprep.subr.bf16.mxu0 %v508
    %690 = vmatpush1.bf16.msra.mxu0 %v507
    %691 = vmatprep.subr.bf16.mxu0 %v506
    %692 = vmatpush1.bf16.msra.mxu0 %v505
    %693 = vmatprep.subr.bf16.mxu0 %v504
    %694 = vmatpush1.bf16.msra.mxu0 %v503
    %695 = vmatprep.subr.bf16.mxu0 %v502
    %696 = vmatpush1.bf16.msra.mxu0 %v501
    %697 = vmatprep.subr.bf16.mxu0 %v500
    %698 = vmatpush1.bf16.msra.mxu0 %v499
    %699 = vmatprep.subr.bf16.mxu0 %v498
    %700 = vmatpush1.bf16.msra.mxu0 %v497
    %701 = vmatprep.subr.bf16.mxu0 %v496
    %702 = vmatpush1.bf16.msra.mxu0 %v495
    %703 = vmatprep.subr.bf16.mxu0 %v526
    %704 = vmatpush2.bf16.msra.mxu0 %v525
    %705 = vmatprep.subr.bf16.mxu0 %v524
    %706 = vmatpush2.bf16.msra.mxu0 %v523
    %707 = vmatprep.subr.bf16.mxu0 %v522
    %708 = vmatpush2.bf16.msra.mxu0 %v521
    %709 = vmatprep.subr.bf16.mxu0 %v520
    %710 = vmatpush2.bf16.msra.mxu0 %v519
    %711 = vmatprep.subr.bf16.mxu0 %v518
    %712 = vmatpush2.bf16.msra.mxu0 %v517
    %713 = vmatprep.subr.bf16.mxu0 %v516
    %714 = vmatpush2.bf16.msra.mxu0 %v515
    %715 = vmatprep.subr.bf16.mxu0 %v514
    %716 = vmatpush2.bf16.msra.mxu0 %v513
    %717 = vmatprep.subr.bf16.mxu0 %v512
    %718 = vmatpush2.bf16.msra.mxu0 %v511
    %719 = vmatprep.mubr.bf16.mxu0 %v196
    %720 = vmatmul.mubr.bf16.gmra.mxu0 %v195
    %v721 = vpop.f32.mrf.mxu0
    %v722 = vadd.f32 %v170, %v721
    %v723 = vpop.f32.mrf.mxu0
    %v724 = vadd.f32 %v174, %v723
    %v725 = vpop.f32.mrf.mxu0
    %v726 = vadd.f32 %v170, %v725
    %v727 = vpop.f32.mrf.mxu0
    %v728 = vadd.f32 %v174, %v727
    %729 = vdwg.mxu0
    %730 = vmatprep.subr.bf16.mxu0 %v542
    %731 = vmatpush1.bf16.msra.mxu0 %v541
    %732 = vmatprep.subr.bf16.mxu0 %v540
    %733 = vmatpush1.bf16.msra.mxu0 %v539
    %734 = vmatprep.subr.bf16.mxu0 %v538
    %735 = vmatpush1.bf16.msra.mxu0 %v537
    %736 = vmatprep.subr.bf16.mxu0 %v536
    %737 = vmatpush1.bf16.msra.mxu0 %v535
    %738 = vmatprep.subr.bf16.mxu0 %v534
    %739 = vmatpush1.bf16.msra.mxu0 %v533
    %740 = vmatprep.subr.bf16.mxu0 %v532
    %741 = vmatpush1.bf16.msra.mxu0 %v531
    %742 = vmatprep.subr.bf16.mxu0 %v530
    %743 = vmatpush1.bf16.msra.mxu0 %v529
    %744 = vmatprep.subr.bf16.mxu0 %v528
    %745 = vmatpush1.bf16.msra.mxu0 %v527
    %746 = vmatprep.subr.bf16.mxu0 %v558
    %747 = vmatpush2.bf16.msra.mxu0 %v557
    %748 = vmatprep.subr.bf16.mxu0 %v556
    %749 = vmatpush2.bf16.msra.mxu0 %v555
    %750 = vmatprep.subr.bf16.mxu0 %v554
    %751 = vmatpush2.bf16.msra.mxu0 %v553
    %752 = vmatprep.subr.bf16.mxu0 %v552
    %753 = vmatpush2.bf16.msra.mxu0 %v551
    %754 = vmatprep.subr.bf16.mxu0 %v550
    %755 = vmatpush2.bf16.msra.mxu0 %v549
    %756 = vmatprep.subr.bf16.mxu0 %v548
    %757 = vmatpush2.bf16.msra.mxu0 %v547
    %758 = vmatprep.subr.bf16.mxu0 %v546
    %759 = vmatpush2.bf16.msra.mxu0 %v545
    %760 = vmatprep.subr.bf16.mxu0 %v544
    %761 = vmatpush2.bf16.msra.mxu0 %v543
    %762 = vmatprep.mubr.bf16.mxu0 %v198
    %763 = vmatmul.mubr.bf16.gmra.mxu0 %v197
    %v764 = vpop.f32.mrf.mxu0
    %v765 = vadd.f32 %v722, %v764
    %v766 = vpop.f32.mrf.mxu0
    %v767 = vadd.f32 %v724, %v766
    %v768 = vpop.f32.mrf.mxu0
    %v769 = vadd.f32 %v726, %v768
    %v770 = vpop.f32.mrf.mxu0
    %v771 = vadd.f32 %v728, %v770
    %772 = vdwg.mxu0
    %773 = vmatprep.subr.bf16.mxu0 %v574
    %774 = vmatpush1.bf16.msra.mxu0 %v573
    %775 = vmatprep.subr.bf16.mxu0 %v572
    %776 = vmatpush1.bf16.msra.mxu0 %v571
    %777 = vmatprep.subr.bf16.mxu0 %v570
    %778 = vmatpush1.bf16.msra.mxu0 %v569
    %779 = vmatprep.subr.bf16.mxu0 %v568
    %780 = vmatpush1.bf16.msra.mxu0 %v567
    %781 = vmatprep.subr.bf16.mxu0 %v566
    %782 = vmatpush1.bf16.msra.mxu0 %v565
    %783 = vmatprep.subr.bf16.mxu0 %v564
    %784 = vmatpush1.bf16.msra.mxu0 %v563
    %785 = vmatprep.subr.bf16.mxu0 %v562
    %786 = vmatpush1.bf16.msra.mxu0 %v561
    %787 = vmatprep.subr.bf16.mxu0 %v560
    %788 = vmatpush1.bf16.msra.mxu0 %v559
    %789 = vmatprep.subr.bf16.mxu0 %v590
    %790 = vmatpush2.bf16.msra.mxu0 %v589
    %791 = vmatprep.subr.bf16.mxu0 %v588
    %792 = vmatpush2.bf16.msra.mxu0 %v587
    %793 = vmatprep.subr.bf16.mxu0 %v586
    %794 = vmatpush2.bf16.msra.mxu0 %v585
    %795 = vmatprep.subr.bf16.mxu0 %v584
    %796 = vmatpush2.bf16.msra.mxu0 %v583
    %797 = vmatprep.subr.bf16.mxu0 %v582
    %798 = vmatpush2.bf16.msra.mxu0 %v581
    %799 = vmatprep.subr.bf16.mxu0 %v580
    %800 = vmatpush2.bf16.msra.mxu0 %v579
    %801 = vmatprep.subr.bf16.mxu0 %v578
    %802 = vmatpush2.bf16.msra.mxu0 %v577
    %803 = vmatprep.subr.bf16.mxu0 %v576
    %804 = vmatpush2.bf16.msra.mxu0 %v575
    %805 = vmatprep.mubr.bf16.mxu0 %v200
    %806 = vmatmul.mubr.bf16.gmra.mxu0 %v199
    %v807 = vpop.f32.mrf.mxu0
    %v808 = vadd.f32 %v765, %v807
    %v809 = vpop.f32.mrf.mxu0
    %v810 = vadd.f32 %v767, %v809
    %v811 = vpop.f32.mrf.mxu0
    %v812 = vadd.f32 %v769, %v811
    %v813 = vpop.f32.mrf.mxu0
    %v814 = vadd.f32 %v771, %v813
    %815 = vdwg.mxu0
    %v816 = vmax.f32 %v808, 0.0
    %v817 = vmax.f32 %v810, 0.0
    %v818 = vmax.f32 %v812, 0.0
    %v819 = vmax.f32 %v814, 0.0
    %v820 = vpack.c.bf16 %v818, %v816
    %v821 = vpack.c.bf16 %v819, %v817
    %v822 = vld [vmem:[#allocation7] sm:$0xf]
    %v823 = vld [vmem:[#allocation7 + $0x4] sm:$0xf]
    %v824 = vld [vmem:[#allocation7 + $0x8] sm:$0xf]
    %v825 = vld [vmem:[#allocation7 + $0xc] sm:$0xf]
    %v826 = vld [vmem:[#allocation7 + $0x10] sm:$0xf]
    %v827 = vld [vmem:[#allocation7 + $0x14] sm:$0xf]
    %v828 = vld [vmem:[#allocation7 + $0x18] sm:$0xf]
    %v829 = vld [vmem:[#allocation7 + $0x1c] sm:$0xf]
    %v830 = vld [vmem:[#allocation7 + $0x20] sm:$0xf]
    %v831 = vld [vmem:[#allocation7 + $0x24] sm:$0xf]
    %v832 = vld [vmem:[#allocation7 + $0x28] sm:$0xf]
    %v833 = vld [vmem:[#allocation7 + $0x2c] sm:$0xf]
    %v834 = vld [vmem:[#allocation7 + $0x30] sm:$0xf]
    %v835 = vld [vmem:[#allocation7 + $0x34] sm:$0xf]
    %v836 = vld [vmem:[#allocation7 + $0x38] sm:$0xf]
    %v837 = vld [vmem:[#allocation7 + $0x3c] sm:$0xf]
    %v838 = vld [vmem:[#allocation7 + $0x40] sm:$0xf]
    %v839 = vld [vmem:[#allocation7 + $0x44] sm:$0xf]
    %v840 = vld [vmem:[#allocation7 + $0x48] sm:$0xf]
    %v841 = vld [vmem:[#allocation7 + $0x4c] sm:$0xf]
    %v842 = vld [vmem:[#allocation7 + $0x50] sm:$0xf]
    %v843 = vld [vmem:[#allocation7 + $0x54] sm:$0xf]
    %v844 = vld [vmem:[#allocation7 + $0x58] sm:$0xf]
    %v845 = vld [vmem:[#allocation7 + $0x5c] sm:$0xf]
    %v846 = vld [vmem:[#allocation7 + $0x60] sm:$0xf]
    %v847 = vld [vmem:[#allocation7 + $0x64] sm:$0xf]
    %v848 = vld [vmem:[#allocation7 + $0x68] sm:$0xf]
    %v849 = vld [vmem:[#allocation7 + $0x6c] sm:$0xf]
    %v850 = vld [vmem:[#allocation7 + $0x70] sm:$0xf]
    %v851 = vld [vmem:[#allocation7 + $0x74] sm:$0xf]
    %v852 = vld [vmem:[#allocation7 + $0x78] sm:$0xf]
    %v853 = vld [vmem:[#allocation7 + $0x7c] sm:$0xf]
    %v854 = vld [vmem:[%s4] sm:$0x1]
    %v856 = vlaneseq
    %v857 = vshrl.u32 %v856, 7
    %v858 = vsub.s32 0, %v857
    %v859 = vrot.slane %v854, %v858
    %v893 = vunpack.c.l.b16 %v822
    %v894 = vunpack.c.l.b16 %v823
    %v895 = vunpack.c.l.b16 %v824
    %v896 = vunpack.c.l.b16 %v825
    %v897 = vunpack.c.l.b16 %v826
    %v898 = vunpack.c.l.b16 %v827
    %v899 = vunpack.c.l.b16 %v828
    %v900 = vunpack.c.l.b16 %v829
    %v901 = vunpack.c.l.b16 %v830
    %v902 = vunpack.c.l.b16 %v831
    %v903 = vunpack.c.l.b16 %v832
    %v904 = vunpack.c.l.b16 %v833
    %v905 = vunpack.c.l.b16 %v834
    %v906 = vunpack.c.l.b16 %v835
    %v907 = vunpack.c.l.b16 %v836
    %v908 = vunpack.c.l.b16 %v837
    %v909 = vunpack.c.l.b16 %v838
    %v910 = vunpack.c.l.b16 %v839
    %v911 = vunpack.c.l.b16 %v840
    %v912 = vunpack.c.l.b16 %v841
    %v913 = vunpack.c.l.b16 %v842
    %v914 = vunpack.c.l.b16 %v843
    %v915 = vunpack.c.l.b16 %v844
    %v916 = vunpack.c.l.b16 %v845
    %v917 = vunpack.c.l.b16 %v846
    %v918 = vunpack.c.l.b16 %v847
    %v919 = vunpack.c.l.b16 %v848
    %v920 = vunpack.c.l.b16 %v849
    %v921 = vunpack.c.l.b16 %v850
    %v922 = vunpack.c.l.b16 %v851
    %v923 = vunpack.c.l.b16 %v852
    %v924 = vunpack.c.l.b16 %v853
    %v925 = vpack.c.b16 %v894, %v893
    %v926 = vpack.c.b16 %v896, %v895
    %v927 = vpack.c.b16 %v898, %v897
    %v928 = vpack.c.b16 %v900, %v899
    %v929 = vpack.c.b16 %v902, %v901
    %v930 = vpack.c.b16 %v904, %v903
    %v931 = vpack.c.b16 %v906, %v905
    %v932 = vpack.c.b16 %v908, %v907
    %v933 = vpack.c.b16 %v910, %v909
    %v934 = vpack.c.b16 %v912, %v911
    %v935 = vpack.c.b16 %v914, %v913
    %v936 = vpack.c.b16 %v916, %v915
    %v937 = vpack.c.b16 %v918, %v917
    %v938 = vpack.c.b16 %v920, %v919
    %v939 = vpack.c.b16 %v922, %v921
    %v940 = vpack.c.b16 %v924, %v923
    %957 = vmatprep.subr.bf16.mxu0 0
    %958 = vmatpush1.bf16.msra.mxu0 %v932
    %959 = vmatprep.subr.bf16.mxu0 0
    %960 = vmatpush1.bf16.msra.mxu0 %v931
    %961 = vmatprep.subr.bf16.mxu0 0
    %962 = vmatpush1.bf16.msra.mxu0 %v930
    %963 = vmatprep.subr.bf16.mxu0 0
    %964 = vmatpush1.bf16.msra.mxu0 %v929
    %965 = vmatprep.subr.bf16.mxu0 0
    %966 = vmatpush1.bf16.msra.mxu0 %v928
    %967 = vmatprep.subr.bf16.mxu0 0
    %968 = vmatpush1.bf16.msra.mxu0 %v927
    %969 = vmatprep.subr.bf16.mxu0 0
    %970 = vmatpush1.bf16.msra.mxu0 %v926
    %971 = vmatprep.subr.bf16.mxu0 0
    %972 = vmatpush1.bf16.msra.mxu0 %v925
    %973 = vmatprep.subr.bf16.mxu0 0
    %974 = vmatpush2.bf16.msra.mxu0 %v940
    %975 = vmatprep.subr.bf16.mxu0 0
    %976 = vmatpush2.bf16.msra.mxu0 %v939
    %977 = vmatprep.subr.bf16.mxu0 0
    %978 = vmatpush2.bf16.msra.mxu0 %v938
    %979 = vmatprep.subr.bf16.mxu0 0
    %980 = vmatpush2.bf16.msra.mxu0 %v937
    %981 = vmatprep.subr.bf16.mxu0 0
    %982 = vmatpush2.bf16.msra.mxu0 %v936
    %983 = vmatprep.subr.bf16.mxu0 0
    %984 = vmatpush2.bf16.msra.mxu0 %v935
    %985 = vmatprep.subr.bf16.mxu0 0
    %986 = vmatpush2.bf16.msra.mxu0 %v934
    %987 = vmatprep.subr.bf16.mxu0 0
    %988 = vmatpush2.bf16.msra.mxu0 %v933
    %989 = vmatprep.mubr.bf16.mxu0 %v821
    %990 = vmatmul.mubr.bf16.gmra.mxu0 %v820
    %v991 = vpop.f32.mrf.mxu0
    %v992 = vadd.f32 %v859, %v991
    %v993 = vpop.f32.mrf.mxu0
    %v994 = vpop.f32.mrf.mxu0
    %v995 = vadd.f32 %v859, %v994
    %v996 = vpop.f32.mrf.mxu0
    %997 = vdwg.mxu0
    %998 = vst [vmem:[#allocation8] sm:$0xff] %v992
    %999 = vst [vmem:[#allocation8 + $0x8] sm:$0xff] %v995
    // Predicated region
    $region34: #{tpu_custom_call.1} parent=1 // pred_check
      _
    $region35: #{tpu_custom_call.1} parent=1 // pred_check_branch
      %1001 = sbr.rel (0) target = $region37
    $region36: #{tpu_custom_call.1} parent=1 // pred_region
      %s1003 = ssub.s32 256, 256
      %1004 = vsyncadd [#allocation4], %s1003
      %s1005 = sshll.u32 [#allocation8], 4
      %s1006 = int_to_ptr.vmem [resolvable:$true] %s1005
      %1011 = dma.vmem_to_hbm [thread:$0]  %s1006, 256, %s5, [#allocation4], 128, 128, 8
    $region37: #{tpu_custom_call.1} parent=1 // pred_fallthru
      _
    // Predicated region
    $region38: #{tpu_custom_call.1} parent=1 // pred_check
      _
    $region39: #{tpu_custom_call.1} parent=1 // pred_check_branch
      %1013 = sbr.rel (0) target = $region41
    $region40: #{tpu_custom_call.1} parent=1 // pred_region
      %1014 = dma.done [#allocation4], 256
    $region41: #{tpu_custom_call.1} parent=1 // pred_fallthru
      _
    %1015 = vsyncpa [#allocation3], 1
    %1016 = vsyncpa [#allocation6], 1
    %1017 = vsyncpa [#allocation4], 1

</llo_original>
